<compile_context>
chip_gen: v5e
topology: v5e:2x2
jax: 0.10.0
libtpu: 0.0.40
codegen_flags: <defaults>
</compile_context>

<pallas_src>
import functools

import jax
import jax.numpy as jnp
from jax.experimental import pallas as pl
from jax.experimental.pallas import tpu as pltpu


def _nvae_cell_kernel(x_ref,                 # (C, HW) f32 channel-major image
                      w1t_ref, b1_ref,       # (EC, C) bf16, (EC, 1) f32  [BN1/BN2 folded]
                      wdwt_ref, bdw_ref,     # (EC, 25) f32, (EC, 1) f32  [BN3 folded]
                      w2t_ref, b2_ref,       # (C, EC) bf16, (C, 1) f32   [BN4 folded]
                      wse1_ref, wse2t_ref,   # (C, CR) f32 each
                      out_ref,               # (C, HW) f32
                      *, H, W):
    C, HW = x_ref.shape
    EC = w1t_ref.shape[0]

    xf = x_ref[...]                                        # f32, reused for residual

    # ---- 1x1 conv C -> EC (BN1/BN2 folded), MXU-native, f32 accumulate ------
    h = jnp.dot(w1t_ref[...], xf.astype(jnp.bfloat16),
                preferred_element_type=jnp.float32)        # (EC, HW) f32
    h = h + b1_ref[...]
    h = h * jax.nn.sigmoid(h)                              # SiLU

    # ---- depthwise 5x5 conv, 'replicate' padding, in (EC, HW) layout --------
    # Tiny (1, HW) edge masks instead of a full-tensor iota held across taps.
    lane = jax.lax.broadcasted_iota(jnp.int32, (1, HW), 1)
    if (W & (W - 1)) == 0:
        j_idx = lane & (W - 1)
    else:  # general W: exact float floor-div (lane < 2^24)
        j_idx = lane - jnp.floor(
            (lane.astype(jnp.float32) + 0.5) * (1.0 / W)).astype(jnp.int32) * W
    at_left = j_idx == 0
    at_right = j_idx == W - 1
    at_top = lane < W
    at_bot = lane >= (H - 1) * W

    def shift_col(t, plus):
        # one-step column shift with edge replicate: sample clamp(j +/- 1)
        if plus:
            return jnp.where(at_right, t, pltpu.roll(t, shift=HW - 1, axis=1))
        return jnp.where(at_left, t, pltpu.roll(t, shift=1, axis=1))

    def shift_row(t, plus):
        # one-step row shift with edge replicate: sample clamp(i +/- 1)
        if plus:
            return jnp.where(at_bot, t, pltpu.roll(t, shift=HW - W, axis=1))
        return jnp.where(at_top, t, pltpu.roll(t, shift=W, axis=1))

    # Column-clamped views hc[oj+2][c, i*W+j] = h[c, i*W + clamp(j+oj)] (4 rolls).
    hc = [None] * 5
    hc[2] = h
    hc[3] = shift_col(hc[2], True)
    hc[4] = shift_col(hc[3], True)
    hc[1] = shift_col(hc[2], False)
    hc[0] = shift_col(hc[1], False)

    wdw = wdwt_ref[...]                                    # (EC, 25), loaded once
    acc = None                                             # first term inits acc
    for oi in range(-2, 3):
        g = None
        for oj in range(-2, 3):
            tap = (oi + 2) * 5 + (oj + 2)
            term = hc[oj + 2] * wdw[:, tap:tap + 1]        # (EC, HW) * (EC, 1)
            g = term if g is None else g + term
        for _ in range(abs(oi)):                           # row clamp (6 rolls total)
            g = shift_row(g, oi > 0)
        acc = g if acc is None else acc + g

    h = acc + bdw_ref[...]                                 # (EC, HW)
    h = h * jax.nn.sigmoid(h)                              # SiLU

    # ---- 1x1 conv EC -> C (BN4 folded), MXU-native, channel-major out -------
    r = jnp.dot(w2t_ref[...], h.astype(jnp.bfloat16),
                preferred_element_type=jnp.float32)        # (C, HW) f32
    r = r + b2_ref[...]

    # ---- SE: global avg pool -> FC -> ReLU -> FC -> sigmoid gate ------------
    pooled = jnp.mean(r, axis=1, keepdims=True)                              # (C, 1)
    hidden = jnp.maximum(
        jnp.sum(wse1_ref[...] * pooled, axis=0, keepdims=True), 0.0)         # (1, CR)
    gate = jax.nn.sigmoid(
        jnp.sum(wse2t_ref[...] * hidden, axis=1, keepdims=True))             # (C, 1)

    # ---- gate, residual add, lane-dense store --------------------------------
    out_ref[...] = (xf + r * gate).astype(out_ref.dtype)


def nvae_generative_residual_cell(x_nchw, params, *, eps=1e-5):
    N, C, H, W = x_nchw.shape
    HW = H * W
    # Single channel-major f32 view of x (free reshape, no transpose).
    x_chw = x_nchw.astype(jnp.float32).reshape(N, C, HW)

    def fold(bn):
        gamma, beta, mean, var = bn
        s = gamma / jnp.sqrt(var + eps)
        return s, beta - mean * s

    s1, t1 = fold(params["bn1"])
    s2, t2 = fold(params["bn2"])
    s3, t3 = fold(params["bn3"])
    s4, t4 = fold(params["bn4"])

    w1, b1 = params["w1"], params["b1"]          # (C, EC), (EC,)
    wdw, bdw = params["wdw"], params["bdw"]      # (25, EC), (EC,)
    w2, b2 = params["w2"], params["b2"]          # (EC, C), (C,)

    # BN folding, all stored channel-major for the kernel.
    W1T = ((s1[:, None] * w1) * s2[None, :]).T               # (EC, C)
    B1 = (((t1 @ w1) + b1) * s2 + t2)[:, None]               # (EC, 1)
    WDWT = (wdw * s3[None, :]).T                             # (EC, 25)
    BDW = (bdw * s3 + t3)[:, None]                           # (EC, 1)
    W2T = (w2 * s4[None, :]).T                               # (C, EC)
    B2 = (b2 * s4 + t4)[:, None]                             # (C, 1)

    wse1 = params["wse1"]                                    # (C, CR)
    wse2t = params["wse2"].T                                 # (C, CR)
    EC = W1T.shape[0]
    CR = wse1.shape[1]

    def const_spec(shape):
        nd = len(shape)
        return pl.BlockSpec(shape, lambda n, _nd=nd: (0,) * _nd)

    kernel = functools.partial(_nvae_cell_kernel, H=H, W=W)

    out = pl.pallas_call(
        kernel,
        out_shape=jax.ShapeDtypeStruct((N, C, HW), jnp.float32),
        grid=(N,),
        in_specs=[
            pl.BlockSpec((None, C, HW), lambda n: (n, 0, 0)),
            const_spec((EC, C)), const_spec((EC, 1)),
            const_spec((EC, 25)), const_spec((EC, 1)),
            const_spec((C, EC)), const_spec((C, 1)),
            const_spec((C, CR)), const_spec((C, CR)),
        ],
        out_specs=pl.BlockSpec((None, C, HW), lambda n: (n, 0, 0)),
        compiler_params=pltpu.CompilerParams(dimension_semantics=("parallel",)),
    )(x_chw,
      W1T.astype(jnp.bfloat16), B1,
      WDWT, BDW,
      W2T.astype(jnp.bfloat16), B2,
      wse1, wse2t)

    return out.reshape(N, C, H, W)               # channel-major already: free


# -------------------------- pure-JAX reference (NCHW, f32) -------------------
def reference(x, params):
    eps = 1e-5
    x = x.astype(jnp.float32)

    def bn(h, p):
        g, b, m, v = (t[None, :, None, None] for t in p)
        return (h - m) / jnp.sqrt(v + eps) * g + b

    h = bn(x, params["bn1"])
    h = jnp.einsum("nchw,co->nohw", h, params["w1"]) + params["b1"][None, :, None, None]
    h = bn(h, params["bn2"])
    h = h * jax.nn.sigmoid(h)
    H, W = h.shape[2], h.shape[3]
    EC = h.shape[1]
    hp = jnp.pad(h, ((0, 0), (0, 0), (2, 2), (2, 2)), mode="edge")
    wdw = params["wdw"].reshape(5, 5, EC)
    acc = jnp.zeros_like(h)
    for di in range(5):
        for dj in range(5):
            acc = acc + hp[:, :, di:di + H, dj:dj + W] * wdw[di, dj][None, :, None, None]
    h = acc + params["bdw"][None, :, None, None]
    h = bn(h, params["bn3"])
    h = h * jax.nn.sigmoid(h)
    h = jnp.einsum("nchw,co->nohw", h, params["w2"]) + params["b2"][None, :, None, None]
    h = bn(h, params["bn4"])
    pooled = jnp.mean(h, axis=(2, 3))                                # (N, C)
    se = jax.nn.relu(pooled @ params["wse1"])
    se = jax.nn.sigmoid(se @ params["wse2"])
    h = h * se[:, :, None, None]
    return x + h


def init_params(key, c, e_features, reduction=16):
    ec = c * e_features
    cr = (c + reduction - 1) // reduction
    ks = jax.random.split(key, 12)

    def bn(k, n):
        k1, k2, k3, k4 = jax.random.split(k, 4)
        return (jax.random.uniform(k1, (n,), jnp.float32, 0.8, 1.2),
                jax.random.uniform(k2, (n,), jnp.float32, -0.1, 0.1),
                jax.random.uniform(k3, (n,), jnp.float32, -0.1, 0.1),
                jax.random.uniform(k4, (n,), jnp.float32, 0.5, 1.5))

    return dict(
        bn1=bn(ks[0], c),
        w1=jax.random.normal(ks[1], (c, ec), jnp.float32) * 0.2,
        b1=jax.random.normal(ks[2], (ec,), jnp.float32) * 0.05,
        bn2=bn(ks[3], ec),
        wdw=jax.random.normal(ks[4], (25, ec), jnp.float32) * 0.1,
        bdw=jax.random.normal(ks[5], (ec,), jnp.float32) * 0.05,
        bn3=bn(ks[6], ec),
        w2=jax.random.normal(ks[7], (ec, c), jnp.float32) * 0.1,
        b2=jax.random.normal(ks[8], (c,), jnp.float32) * 0.05,
        bn4=bn(ks[9], c),
        wse1=jax.random.normal(ks[10], (c, cr), jnp.float32) * 0.3,
        wse2=jax.random.normal(ks[11], (cr, c), jnp.float32) * 0.3,
    )


if __name__ == "__main__":
    N, C, H, W = 2, 8, 16, 16         # num_features = 8
    E = 4                             # e_features = 4 -> expanded channels = 32
    key = jax.random.PRNGKey(0)
    kx, kp = jax.random.split(key)
    x = jax.random.normal(kx, (N, C, H, W), jnp.float32)
    params = init_params(kp, C, E)

    y = nvae_generative_residual_cell(x, params)
    y = jax.block_until_ready(y)

    y_ref = reference(x, params)
    err = float(jnp.max(jnp.abs(y - y_ref)))
    # Tolerance loosened vs. the pure-f32 reference because the two 1x1 convs
    # feed the MXU bf16 operands (f32 accumulation); depthwise/SE/residual f32.
    assert jnp.allclose(y, y_ref, atol=2e-2, rtol=2e-2), f"max abs err {err}"
    print("KERNEL_OK")
</pallas_src>

<mosaic_0001>
module attributes {stable_mosaic.version = 11 : i64} {
  func.func @_nvae_cell_kernel(%arg0: i32, %arg1: memref<1x8x256xf32, #tpu.memory_space<vmem>>, %arg2: memref<32x8xbf16, #tpu.memory_space<vmem>>, %arg3: memref<32x1xf32, #tpu.memory_space<vmem>>, %arg4: memref<32x25xf32, #tpu.memory_space<vmem>>, %arg5: memref<32x1xf32, #tpu.memory_space<vmem>>, %arg6: memref<8x32xbf16, #tpu.memory_space<vmem>>, %arg7: memref<8x1xf32, #tpu.memory_space<vmem>>, %arg8: memref<8x1xf32, #tpu.memory_space<vmem>>, %arg9: memref<8x1xf32, #tpu.memory_space<vmem>>, %arg10: memref<1x8x256xf32, #tpu.memory_space<vmem>>) attributes {dimension_semantics = [#tpu.dimension_semantics<parallel>], iteration_bounds = array<i64: 2>, scalar_prefetch = 0 : i64, scratch_operands = 0 : i64, tpu.core_type = #tpu.core_type<tc>, window_params = [{transform_indices = @transform_0, window_bounds = array<i64: 1, 8, 256>}, {pipeline_mode = #tpu.pipeline_mode<synchronous>, transform_indices = @transform_1, window_bounds = array<i64: 32, 8>}, {pipeline_mode = #tpu.pipeline_mode<synchronous>, transform_indices = @transform_2, window_bounds = array<i64: 32, 1>}, {pipeline_mode = #tpu.pipeline_mode<synchronous>, transform_indices = @transform_3, window_bounds = array<i64: 32, 25>}, {pipeline_mode = #tpu.pipeline_mode<synchronous>, transform_indices = @transform_4, window_bounds = array<i64: 32, 1>}, {pipeline_mode = #tpu.pipeline_mode<synchronous>, transform_indices = @transform_5, window_bounds = array<i64: 8, 32>}, {pipeline_mode = #tpu.pipeline_mode<synchronous>, transform_indices = @transform_6, window_bounds = array<i64: 8, 1>}, {pipeline_mode = #tpu.pipeline_mode<synchronous>, transform_indices = @transform_7, window_bounds = array<i64: 8, 1>}, {pipeline_mode = #tpu.pipeline_mode<synchronous>, transform_indices = @transform_8, window_bounds = array<i64: 8, 1>}, {transform_indices = @transform_9, window_bounds = array<i64: 1, 8, 256>}]} {
    %c0 = arith.constant 0 : index
    %c0_0 = arith.constant 0 : index
    %c0_1 = arith.constant 0 : index
    %0 = vector.load %arg1[%c0, %c0_0, %c0_1] : memref<1x8x256xf32, #tpu.memory_space<vmem>>, vector<1x8x256xf32>
    %1 = vector.shape_cast %0 : vector<1x8x256xf32> to vector<8x256xf32>
    %c0_2 = arith.constant 0 : index
    %c0_3 = arith.constant 0 : index
    %2 = vector.load %arg2[%c0_2, %c0_3] : memref<32x8xbf16, #tpu.memory_space<vmem>>, vector<32x8xbf16>
    %3 = arith.truncf %1 : vector<8x256xf32> to vector<8x256xbf16>
    %cst = arith.constant dense<0.000000e+00> : vector<32x256xf32>
    %4 = tpu.matmul %2, %3, %cst {dimension_numbers = #tpu.dot_dimension_numbers<[1], [0], [0], [1], [0, 0, 1, 1], [], []>} : vector<32x8xbf16>, vector<8x256xbf16>, vector<32x256xf32> -> vector<32x256xf32>
    %c0_4 = arith.constant 0 : index
    %c0_5 = arith.constant 0 : index
    %5 = vector.load %arg3[%c0_4, %c0_5] : memref<32x1xf32, #tpu.memory_space<vmem>>, vector<32x1xf32>
    %6 = vector.broadcast %5 : vector<32x1xf32> to vector<32x256xf32>
    %7 = arith.addf %4, %6 : vector<32x256xf32>
    %8 = arith.negf %7 : vector<32x256xf32>
    %9 = math.exp %8 : vector<32x256xf32>
    %cst_6 = arith.constant 1.000000e+00 : f32
    %10 = vector.broadcast %cst_6 : f32 to vector<32x256xf32>
    %11 = arith.addf %10, %9 : vector<32x256xf32>
    %12 = arith.divf %10, %11 : vector<32x256xf32>
    %13 = arith.mulf %7, %12 : vector<32x256xf32>
    %14 = tpu.iota {dimensions = array<i32: 1>} : vector<1x256xi32>
    %c15_i32 = arith.constant 15 : i32
    %15 = vector.broadcast %c15_i32 : i32 to vector<1x256xi32>
    %16 = arith.andi %14, %15 : vector<1x256xi32>
    %c0_i32 = arith.constant 0 : i32
    %17 = vector.broadcast %c0_i32 : i32 to vector<1x256xi32>
    %18 = arith.cmpi eq, %16, %17 : vector<1x256xi32>
    %c15_i32_7 = arith.constant 15 : i32
    %19 = vector.broadcast %c15_i32_7 : i32 to vector<1x256xi32>
    %20 = arith.cmpi eq, %16, %19 : vector<1x256xi32>
    %c16_i32 = arith.constant 16 : i32
    %21 = vector.broadcast %c16_i32 : i32 to vector<1x256xi32>
    %22 = arith.cmpi slt, %14, %21 : vector<1x256xi32>
    %c240_i32 = arith.constant 240 : i32
    %23 = vector.broadcast %c240_i32 : i32 to vector<1x256xi32>
    %24 = arith.cmpi sge, %14, %23 : vector<1x256xi32>
    %c255_i32 = arith.constant 255 : i32
    %25 = tpu.dynamic_rotate %13 by %c255_i32 dim 1 : vector<32x256xf32>, i32 -> vector<32x256xf32>
    %26 = vector.shape_cast %20 : vector<1x256xi1> to vector<1x256xi1>
    %27 = vector.broadcast %26 : vector<1x256xi1> to vector<32x256xi1>
    %28 = arith.select %27, %13, %25 : vector<32x256xi1>, vector<32x256xf32>
    %c255_i32_8 = arith.constant 255 : i32
    %29 = tpu.dynamic_rotate %28 by %c255_i32_8 dim 1 : vector<32x256xf32>, i32 -> vector<32x256xf32>
    %30 = vector.shape_cast %20 : vector<1x256xi1> to vector<1x256xi1>
    %31 = vector.broadcast %30 : vector<1x256xi1> to vector<32x256xi1>
    %32 = arith.select %31, %28, %29 : vector<32x256xi1>, vector<32x256xf32>
    %c1_i32 = arith.constant 1 : i32
    %33 = tpu.dynamic_rotate %13 by %c1_i32 dim 1 : vector<32x256xf32>, i32 -> vector<32x256xf32>
    %34 = vector.shape_cast %18 : vector<1x256xi1> to vector<1x256xi1>
    %35 = vector.broadcast %34 : vector<1x256xi1> to vector<32x256xi1>
    %36 = arith.select %35, %13, %33 : vector<32x256xi1>, vector<32x256xf32>
    %c1_i32_9 = arith.constant 1 : i32
    %37 = tpu.dynamic_rotate %36 by %c1_i32_9 dim 1 : vector<32x256xf32>, i32 -> vector<32x256xf32>
    %38 = vector.shape_cast %18 : vector<1x256xi1> to vector<1x256xi1>
    %39 = vector.broadcast %38 : vector<1x256xi1> to vector<32x256xi1>
    %40 = arith.select %39, %36, %37 : vector<32x256xi1>, vector<32x256xf32>
    %c0_10 = arith.constant 0 : index
    %c0_11 = arith.constant 0 : index
    %41 = vector.load %arg4[%c0_10, %c0_11] : memref<32x25xf32, #tpu.memory_space<vmem>>, vector<32x25xf32>
    %42 = vector.extract_strided_slice %41 {offsets = [0, 0], sizes = [32, 1], strides = [1, 1]} : vector<32x25xf32> to vector<32x1xf32>
    %43 = vector.broadcast %42 : vector<32x1xf32> to vector<32x256xf32>
    %44 = arith.mulf %40, %43 : vector<32x256xf32>
    %45 = vector.extract_strided_slice %41 {offsets = [0, 1], sizes = [32, 1], strides = [1, 1]} : vector<32x25xf32> to vector<32x1xf32>
    %46 = vector.broadcast %45 : vector<32x1xf32> to vector<32x256xf32>
    %47 = arith.mulf %36, %46 : vector<32x256xf32>
    %48 = arith.addf %44, %47 : vector<32x256xf32>
    %49 = vector.extract_strided_slice %41 {offsets = [0, 2], sizes = [32, 1], strides = [1, 1]} : vector<32x25xf32> to vector<32x1xf32>
    %50 = vector.broadcast %49 : vector<32x1xf32> to vector<32x256xf32>
    %51 = arith.mulf %13, %50 : vector<32x256xf32>
    %52 = arith.addf %48, %51 : vector<32x256xf32>
    %53 = vector.extract_strided_slice %41 {offsets = [0, 3], sizes = [32, 1], strides = [1, 1]} : vector<32x25xf32> to vector<32x1xf32>
    %54 = vector.broadcast %53 : vector<32x1xf32> to vector<32x256xf32>
    %55 = arith.mulf %28, %54 : vector<32x256xf32>
    %56 = arith.addf %52, %55 : vector<32x256xf32>
    %57 = vector.extract_strided_slice %41 {offsets = [0, 4], sizes = [32, 1], strides = [1, 1]} : vector<32x25xf32> to vector<32x1xf32>
    %58 = vector.broadcast %57 : vector<32x1xf32> to vector<32x256xf32>
    %59 = arith.mulf %32, %58 : vector<32x256xf32>
    %60 = arith.addf %56, %59 : vector<32x256xf32>
    %c16_i32_12 = arith.constant 16 : i32
    %61 = tpu.dynamic_rotate %60 by %c16_i32_12 dim 1 : vector<32x256xf32>, i32 -> vector<32x256xf32>
    %62 = vector.shape_cast %22 : vector<1x256xi1> to vector<1x256xi1>
    %63 = vector.broadcast %62 : vector<1x256xi1> to vector<32x256xi1>
    %64 = arith.select %63, %60, %61 : vector<32x256xi1>, vector<32x256xf32>
    %c16_i32_13 = arith.constant 16 : i32
    %65 = tpu.dynamic_rotate %64 by %c16_i32_13 dim 1 : vector<32x256xf32>, i32 -> vector<32x256xf32>
    %66 = vector.shape_cast %22 : vector<1x256xi1> to vector<1x256xi1>
    %67 = vector.broadcast %66 : vector<1x256xi1> to vector<32x256xi1>
    %68 = arith.select %67, %64, %65 : vector<32x256xi1>, vector<32x256xf32>
    %69 = vector.extract_strided_slice %41 {offsets = [0, 5], sizes = [32, 1], strides = [1, 1]} : vector<32x25xf32> to vector<32x1xf32>
    %70 = vector.broadcast %69 : vector<32x1xf32> to vector<32x256xf32>
    %71 = arith.mulf %40, %70 : vector<32x256xf32>
    %72 = vector.extract_strided_slice %41 {offsets = [0, 6], sizes = [32, 1], strides = [1, 1]} : vector<32x25xf32> to vector<32x1xf32>
    %73 = vector.broadcast %72 : vector<32x1xf32> to vector<32x256xf32>
    %74 = arith.mulf %36, %73 : vector<32x256xf32>
    %75 = arith.addf %71, %74 : vector<32x256xf32>
    %76 = vector.extract_strided_slice %41 {offsets = [0, 7], sizes = [32, 1], strides = [1, 1]} : vector<32x25xf32> to vector<32x1xf32>
    %77 = vector.broadcast %76 : vector<32x1xf32> to vector<32x256xf32>
    %78 = arith.mulf %13, %77 : vector<32x256xf32>
    %79 = arith.addf %75, %78 : vector<32x256xf32>
    %80 = vector.extract_strided_slice %41 {offsets = [0, 8], sizes = [32, 1], strides = [1, 1]} : vector<32x25xf32> to vector<32x1xf32>
    %81 = vector.broadcast %80 : vector<32x1xf32> to vector<32x256xf32>
    %82 = arith.mulf %28, %81 : vector<32x256xf32>
    %83 = arith.addf %79, %82 : vector<32x256xf32>
    %84 = vector.extract_strided_slice %41 {offsets = [0, 9], sizes = [32, 1], strides = [1, 1]} : vector<32x25xf32> to vector<32x1xf32>
    %85 = vector.broadcast %84 : vector<32x1xf32> to vector<32x256xf32>
    %86 = arith.mulf %32, %85 : vector<32x256xf32>
    %87 = arith.addf %83, %86 : vector<32x256xf32>
    %c16_i32_14 = arith.constant 16 : i32
    %88 = tpu.dynamic_rotate %87 by %c16_i32_14 dim 1 : vector<32x256xf32>, i32 -> vector<32x256xf32>
    %89 = vector.shape_cast %22 : vector<1x256xi1> to vector<1x256xi1>
    %90 = vector.broadcast %89 : vector<1x256xi1> to vector<32x256xi1>
    %91 = arith.select %90, %87, %88 : vector<32x256xi1>, vector<32x256xf32>
    %92 = arith.addf %68, %91 : vector<32x256xf32>
    %93 = vector.extract_strided_slice %41 {offsets = [0, 10], sizes = [32, 1], strides = [1, 1]} : vector<32x25xf32> to vector<32x1xf32>
    %94 = vector.broadcast %93 : vector<32x1xf32> to vector<32x256xf32>
    %95 = arith.mulf %40, %94 : vector<32x256xf32>
    %96 = vector.extract_strided_slice %41 {offsets = [0, 11], sizes = [32, 1], strides = [1, 1]} : vector<32x25xf32> to vector<32x1xf32>
    %97 = vector.broadcast %96 : vector<32x1xf32> to vector<32x256xf32>
    %98 = arith.mulf %36, %97 : vector<32x256xf32>
    %99 = arith.addf %95, %98 : vector<32x256xf32>
    %100 = vector.extract_strided_slice %41 {offsets = [0, 12], sizes = [32, 1], strides = [1, 1]} : vector<32x25xf32> to vector<32x1xf32>
    %101 = vector.broadcast %100 : vector<32x1xf32> to vector<32x256xf32>
    %102 = arith.mulf %13, %101 : vector<32x256xf32>
    %103 = arith.addf %99, %102 : vector<32x256xf32>
    %104 = vector.extract_strided_slice %41 {offsets = [0, 13], sizes = [32, 1], strides = [1, 1]} : vector<32x25xf32> to vector<32x1xf32>
    %105 = vector.broadcast %104 : vector<32x1xf32> to vector<32x256xf32>
    %106 = arith.mulf %28, %105 : vector<32x256xf32>
    %107 = arith.addf %103, %106 : vector<32x256xf32>
    %108 = vector.extract_strided_slice %41 {offsets = [0, 14], sizes = [32, 1], strides = [1, 1]} : vector<32x25xf32> to vector<32x1xf32>
    %109 = vector.broadcast %108 : vector<32x1xf32> to vector<32x256xf32>
    %110 = arith.mulf %32, %109 : vector<32x256xf32>
    %111 = arith.addf %107, %110 : vector<32x256xf32>
    %112 = arith.addf %92, %111 : vector<32x256xf32>
    %113 = vector.extract_strided_slice %41 {offsets = [0, 15], sizes = [32, 1], strides = [1, 1]} : vector<32x25xf32> to vector<32x1xf32>
    %114 = vector.broadcast %113 : vector<32x1xf32> to vector<32x256xf32>
    %115 = arith.mulf %40, %114 : vector<32x256xf32>
    %116 = vector.extract_strided_slice %41 {offsets = [0, 16], sizes = [32, 1], strides = [1, 1]} : vector<32x25xf32> to vector<32x1xf32>
    %117 = vector.broadcast %116 : vector<32x1xf32> to vector<32x256xf32>
    %118 = arith.mulf %36, %117 : vector<32x256xf32>
    %119 = arith.addf %115, %118 : vector<32x256xf32>
    %120 = vector.extract_strided_slice %41 {offsets = [0, 17], sizes = [32, 1], strides = [1, 1]} : vector<32x25xf32> to vector<32x1xf32>
    %121 = vector.broadcast %120 : vector<32x1xf32> to vector<32x256xf32>
    %122 = arith.mulf %13, %121 : vector<32x256xf32>
    %123 = arith.addf %119, %122 : vector<32x256xf32>
    %124 = vector.extract_strided_slice %41 {offsets = [0, 18], sizes = [32, 1], strides = [1, 1]} : vector<32x25xf32> to vector<32x1xf32>
    %125 = vector.broadcast %124 : vector<32x1xf32> to vector<32x256xf32>
    %126 = arith.mulf %28, %125 : vector<32x256xf32>
    %127 = arith.addf %123, %126 : vector<32x256xf32>
    %128 = vector.extract_strided_slice %41 {offsets = [0, 19], sizes = [32, 1], strides = [1, 1]} : vector<32x25xf32> to vector<32x1xf32>
    %129 = vector.broadcast %128 : vector<32x1xf32> to vector<32x256xf32>
    %130 = arith.mulf %32, %129 : vector<32x256xf32>
    %131 = arith.addf %127, %130 : vector<32x256xf32>
    %c240_i32_15 = arith.constant 240 : i32
    %132 = tpu.dynamic_rotate %131 by %c240_i32_15 dim 1 : vector<32x256xf32>, i32 -> vector<32x256xf32>
    %133 = vector.shape_cast %24 : vector<1x256xi1> to vector<1x256xi1>
    %134 = vector.broadcast %133 : vector<1x256xi1> to vector<32x256xi1>
    %135 = arith.select %134, %131, %132 : vector<32x256xi1>, vector<32x256xf32>
    %136 = arith.addf %112, %135 : vector<32x256xf32>
    %137 = vector.extract_strided_slice %41 {offsets = [0, 20], sizes = [32, 1], strides = [1, 1]} : vector<32x25xf32> to vector<32x1xf32>
    %138 = vector.broadcast %137 : vector<32x1xf32> to vector<32x256xf32>
    %139 = arith.mulf %40, %138 : vector<32x256xf32>
    %140 = vector.extract_strided_slice %41 {offsets = [0, 21], sizes = [32, 1], strides = [1, 1]} : vector<32x25xf32> to vector<32x1xf32>
    %141 = vector.broadcast %140 : vector<32x1xf32> to vector<32x256xf32>
    %142 = arith.mulf %36, %141 : vector<32x256xf32>
    %143 = arith.addf %139, %142 : vector<32x256xf32>
    %144 = vector.extract_strided_slice %41 {offsets = [0, 22], sizes = [32, 1], strides = [1, 1]} : vector<32x25xf32> to vector<32x1xf32>
    %145 = vector.broadcast %144 : vector<32x1xf32> to vector<32x256xf32>
    %146 = arith.mulf %13, %145 : vector<32x256xf32>
    %147 = arith.addf %143, %146 : vector<32x256xf32>
    %148 = vector.extract_strided_slice %41 {offsets = [0, 23], sizes = [32, 1], strides = [1, 1]} : vector<32x25xf32> to vector<32x1xf32>
    %149 = vector.broadcast %148 : vector<32x1xf32> to vector<32x256xf32>
    %150 = arith.mulf %28, %149 : vector<32x256xf32>
    %151 = arith.addf %147, %150 : vector<32x256xf32>
    %152 = vector.extract_strided_slice %41 {offsets = [0, 24], sizes = [32, 1], strides = [1, 1]} : vector<32x25xf32> to vector<32x1xf32>
    %153 = vector.broadcast %152 : vector<32x1xf32> to vector<32x256xf32>
    %154 = arith.mulf %32, %153 : vector<32x256xf32>
    %155 = arith.addf %151, %154 : vector<32x256xf32>
    %c240_i32_16 = arith.constant 240 : i32
    %156 = tpu.dynamic_rotate %155 by %c240_i32_16 dim 1 : vector<32x256xf32>, i32 -> vector<32x256xf32>
    %157 = vector.shape_cast %24 : vector<1x256xi1> to vector<1x256xi1>
    %158 = vector.broadcast %157 : vector<1x256xi1> to vector<32x256xi1>
    %159 = arith.select %158, %155, %156 : vector<32x256xi1>, vector<32x256xf32>
    %c240_i32_17 = arith.constant 240 : i32
    %160 = tpu.dynamic_rotate %159 by %c240_i32_17 dim 1 : vector<32x256xf32>, i32 -> vector<32x256xf32>
    %161 = vector.shape_cast %24 : vector<1x256xi1> to vector<1x256xi1>
    %162 = vector.broadcast %161 : vector<1x256xi1> to vector<32x256xi1>
    %163 = arith.select %162, %159, %160 : vector<32x256xi1>, vector<32x256xf32>
    %164 = arith.addf %136, %163 : vector<32x256xf32>
    %c0_18 = arith.constant 0 : index
    %c0_19 = arith.constant 0 : index
    %165 = vector.load %arg5[%c0_18, %c0_19] : memref<32x1xf32, #tpu.memory_space<vmem>>, vector<32x1xf32>
    %166 = vector.broadcast %165 : vector<32x1xf32> to vector<32x256xf32>
    %167 = arith.addf %164, %166 : vector<32x256xf32>
    %168 = arith.negf %167 : vector<32x256xf32>
    %169 = math.exp %168 : vector<32x256xf32>
    %cst_20 = arith.constant 1.000000e+00 : f32
    %170 = vector.broadcast %cst_20 : f32 to vector<32x256xf32>
    %171 = arith.addf %170, %169 : vector<32x256xf32>
    %172 = arith.divf %170, %171 : vector<32x256xf32>
    %173 = arith.mulf %167, %172 : vector<32x256xf32>
    %c0_21 = arith.constant 0 : index
    %c0_22 = arith.constant 0 : index
    %174 = vector.load %arg6[%c0_21, %c0_22] : memref<8x32xbf16, #tpu.memory_space<vmem>>, vector<8x32xbf16>
    %175 = arith.truncf %173 : vector<32x256xf32> to vector<32x256xbf16>
    %cst_23 = arith.constant dense<0.000000e+00> : vector<8x256xf32>
    %176 = tpu.matmul %174, %175, %cst_23 {dimension_numbers = #tpu.dot_dimension_numbers<[1], [0], [0], [1], [0, 0, 1, 1], [], []>} : vector<8x32xbf16>, vector<32x256xbf16>, vector<8x256xf32> -> vector<8x256xf32>
    %c0_24 = arith.constant 0 : index
    %c0_25 = arith.constant 0 : index
    %177 = vector.load %arg7[%c0_24, %c0_25] : memref<8x1xf32, #tpu.memory_space<vmem>>, vector<8x1xf32>
    %178 = vector.broadcast %177 : vector<8x1xf32> to vector<8x256xf32>
    %179 = arith.addf %176, %178 : vector<8x256xf32>
    %cst_26 = arith.constant dense<0.000000e+00> : vector<8xf32>
    %180 = vector.multi_reduction <add>, %179, %cst_26 [1] : vector<8x256xf32> to vector<8xf32>
    %181 = vector.shape_cast %180 : vector<8xf32> to vector<8x1xf32>
    %cst_27 = arith.constant 2.560000e+02 : f32
    %182 = vector.broadcast %cst_27 : f32 to vector<8x1xf32>
    %183 = arith.divf %181, %182 : vector<8x1xf32>
    %c0_28 = arith.constant 0 : index
    %c0_29 = arith.constant 0 : index
    %184 = vector.load %arg8[%c0_28, %c0_29] : memref<8x1xf32, #tpu.memory_space<vmem>>, vector<8x1xf32>
    %185 = arith.mulf %184, %183 : vector<8x1xf32>
    %cst_30 = arith.constant dense<0.000000e+00> : vector<1xf32>
    %186 = vector.multi_reduction <add>, %185, %cst_30 [0] : vector<8x1xf32> to vector<1xf32>
    %187 = vector.shape_cast %186 : vector<1xf32> to vector<1x1xf32>
    %cst_31 = arith.constant 0.000000e+00 : f32
    %188 = vector.broadcast %cst_31 : f32 to vector<1x1xf32>
    %189 = arith.maximumf %187, %188 : vector<1x1xf32>
    %c0_32 = arith.constant 0 : index
    %c0_33 = arith.constant 0 : index
    %190 = vector.load %arg9[%c0_32, %c0_33] : memref<8x1xf32, #tpu.memory_space<vmem>>, vector<8x1xf32>
    %191 = vector.broadcast %189 : vector<1x1xf32> to vector<8x1xf32>
    %192 = arith.mulf %190, %191 : vector<8x1xf32>
    %cst_34 = arith.constant dense<0.000000e+00> : vector<8xf32>
    %193 = vector.multi_reduction <add>, %192, %cst_34 [1] : vector<8x1xf32> to vector<8xf32>
    %194 = vector.shape_cast %193 : vector<8xf32> to vector<8x1xf32>
    %195 = arith.negf %194 : vector<8x1xf32>
    %196 = math.exp %195 : vector<8x1xf32>
    %cst_35 = arith.constant 1.000000e+00 : f32
    %197 = vector.broadcast %cst_35 : f32 to vector<8x1xf32>
    %198 = arith.addf %197, %196 : vector<8x1xf32>
    %199 = arith.divf %197, %198 : vector<8x1xf32>
    %200 = vector.broadcast %199 : vector<8x1xf32> to vector<8x256xf32>
    %201 = arith.mulf %179, %200 : vector<8x256xf32>
    %202 = arith.addf %1, %201 : vector<8x256xf32>
    %c0_36 = arith.constant 0 : index
    %c0_37 = arith.constant 0 : index
    %c0_38 = arith.constant 0 : index
    %203 = vector.load %arg10[%c0_36, %c0_37, %c0_38] : memref<1x8x256xf32, #tpu.memory_space<vmem>>, vector<1x8x256xf32>
    %204 = vector.shape_cast %203 : vector<1x8x256xf32> to vector<8x256xf32>
    %205 = vector.shape_cast %202 : vector<8x256xf32> to vector<1x8x256xf32>
    tpu.vector_store %arg10[%c0_36, %c0_37, %c0_38], %205 {strides = array<i32>} : memref<1x8x256xf32, #tpu.memory_space<vmem>>, vector<1x8x256xf32>,
    return
  }
  func.func @transform_0(%arg0: i32) -> (i32, i32, i32) {
    %c0_i32 = arith.constant 0 : i32
    %c0_i32_0 = arith.constant 0 : i32
    %c0_i32_1 = arith.constant 0 : i32
    return %arg0, %c0_i32, %c0_i32_0 : i32, i32, i32
  }
  func.func @transform_1(%arg0: i32) -> (i32, i32) {
    %c0_i32 = arith.constant 0 : i32
    %c0_i32_0 = arith.constant 0 : i32
    %c0_i32_1 = arith.constant 0 : i32
    return %c0_i32, %c0_i32_0 : i32, i32
  }
  func.func @transform_2(%arg0: i32) -> (i32, i32) {
    %c0_i32 = arith.constant 0 : i32
    %c0_i32_0 = arith.constant 0 : i32
    %c0_i32_1 = arith.constant 0 : i32
    return %c0_i32, %c0_i32_0 : i32, i32
  }
  func.func @transform_3(%arg0: i32) -> (i32, i32) {
    %c0_i32 = arith.constant 0 : i32
    %c0_i32_0 = arith.constant 0 : i32
    %c0_i32_1 = arith.constant 0 : i32
    return %c0_i32, %c0_i32_0 : i32, i32
  }
  func.func @transform_4(%arg0: i32) -> (i32, i32) {
    %c0_i32 = arith.constant 0 : i32
    %c0_i32_0 = arith.constant 0 : i32
    %c0_i32_1 = arith.constant 0 : i32
    return %c0_i32, %c0_i32_0 : i32, i32
  }
  func.func @transform_5(%arg0: i32) -> (i32, i32) {
    %c0_i32 = arith.constant 0 : i32
    %c0_i32_0 = arith.constant 0 : i32
    %c0_i32_1 = arith.constant 0 : i32
    return %c0_i32, %c0_i32_0 : i32, i32
  }
  func.func @transform_6(%arg0: i32) -> (i32, i32) {
    %c0_i32 = arith.constant 0 : i32
    %c0_i32_0 = arith.constant 0 : i32
    %c0_i32_1 = arith.constant 0 : i32
    return %c0_i32, %c0_i32_0 : i32, i32
  }
  func.func @transform_7(%arg0: i32) -> (i32, i32) {
    %c0_i32 = arith.constant 0 : i32
    %c0_i32_0 = arith.constant 0 : i32
    %c0_i32_1 = arith.constant 0 : i32
    return %c0_i32, %c0_i32_0 : i32, i32
  }
  func.func @transform_8(%arg0: i32) -> (i32, i32) {
    %c0_i32 = arith.constant 0 : i32
    %c0_i32_0 = arith.constant 0 : i32
    %c0_i32_1 = arith.constant 0 : i32
    return %c0_i32, %c0_i32_0 : i32, i32
  }
  func.func @transform_9(%arg0: i32) -> (i32, i32, i32) {
    %c0_i32 = arith.constant 0 : i32
    %c0_i32_0 = arith.constant 0 : i32
    %c0_i32_1 = arith.constant 0 : i32
    return %arg0, %c0_i32, %c0_i32_0 : i32, i32, i32
  }
}

</mosaic_0001>

<llo_original>
// kernel: tpu_custom_call.1
$region0: #{tpu_custom_call.1}
  #allocation0 [shape = 'u32[]', space=smem, size = 0x4, offset = 0x4, fixed_abs, tag = 'smem constant byte address 0x4 - core index']
  #allocation1 [shape = 'u32[72,128]{1,0:T(1,128)}', space=vmem, size = 0x9000, scoped, tag = 'internal scratch']
  %s0 = inlined_call_operand.vmem [shape: f32[2,8,256], index: 0, kind: input, shape index: {}]
  %s1 = inlined_call_operand.vmem [shape: bf16[32,8], index: 1, kind: input, shape index: {}]
  %s2 = inlined_call_operand.vmem [shape: f32[32,1], index: 2, kind: input, shape index: {}]
  %s3 = inlined_call_operand.vmem [shape: f32[32,25], index: 3, kind: input, shape index: {}]
  %s4 = inlined_call_operand.vmem [shape: f32[32,1], index: 4, kind: input, shape index: {}]
  %s5 = inlined_call_operand.vmem [shape: bf16[8,32], index: 5, kind: input, shape index: {}]
  %s6 = inlined_call_operand.vmem [shape: f32[8,1], index: 6, kind: input, shape index: {}]
  %s7 = inlined_call_operand.vmem [shape: f32[8,1], index: 7, kind: input, shape index: {}]
  %s8 = inlined_call_operand.vmem [shape: f32[8,1], index: 8, kind: input, shape index: {}]
  %s9 = inlined_call_operand.hbm [shape: f32[2,8,256], index: 9, kind: output, shape index: {}]
  %s10 = sld [smem:[#allocation0]]
  $region69: #{tpu_custom_call.1} parent=0
    _
  %s12 = ssub.s32 1, %s10
  %s13 = scalar_select 0, %s12, %s10
  $region1: #{tpu_custom_call.1} parent=0
    #allocation2 [shape = 'u8[16384]{0}', space=vmem, size = 0x4000, scoped, tag = 'output window, operand 0']
    #allocation3 [shape = 's32[2]{0}', space=sflag, size = 0x8, scoped, tag = 'scoped memory for tpu_custom_call.1']
    %14 = vsyncpa [#allocation3], 0
    %s15 = scalar_lea.sflag [#allocation3], 1
    %16 = vsyncpa %s15, 0
    loop: start=0, step=1, limit=4
    $region2: #{tpu_custom_call.1} parent=1 // loop_pre_header
      _
    $region3: #{tpu_custom_call.1} parent=1 // loop_header
      %s18 = sphi 0, %s22
      %p19 = scmp.ge.s32.totalorder %s18, 4
      %s28 = sphi 0, %s30
      %s31 = sphi 0, %s28
      %s32 = sphi 0, %s31
      %s48 = sphi 0, %s32
      %s52 = sphi 0, %s52
      %s54 = sphi 0, %s52
      %s55 = sphi 0, %s54
      %s69 = sphi 0, %s55
      %s73 = sphi 0, %s73
      %s75 = sphi 0, %s73
      %s76 = sphi 0, %s75
      %s90 = sphi 0, %s76
      %s94 = sphi 0, %s94
      %s96 = sphi 0, %s94
      %s97 = sphi 0, %s96
      %s111 = sphi 0, %s97
      %s115 = sphi 0, %s115
      %s117 = sphi 0, %s115
      %s118 = sphi 0, %s117
      %s132 = sphi 0, %s118
      %s136 = sphi 0, %s136
      %s138 = sphi 0, %s136
      %s139 = sphi 0, %s138
      %s153 = sphi 0, %s139
      %s157 = sphi 0, %s157
      %s159 = sphi 0, %s157
      %s160 = sphi 0, %s159
      %s174 = sphi 0, %s160
      %s178 = sphi 0, %s178
      %s180 = sphi 0, %s178
      %s181 = sphi 0, %s180
      %s195 = sphi 0, %s181
      %s199 = sphi 0, %s199
      %s201 = sphi 0, %s199
      %s202 = sphi 0, %s201
      %s216 = sphi 0, %s202
      %s222 = sphi 0, %s224
      %s225 = sphi 0, %s222
      %s226 = sphi 0, %s225
      %s242 = sphi 0, %s226
    $region4: #{tpu_custom_call.1} parent=1 // loop_header_branch
      %21 = sbr.rel (%p19) target = $region8
    $region5: #{tpu_custom_call.1} parent=1 // loop_body
      %s23 = ssub.s32 %s18, 1
      %s24 = ssub.s32 %s18, 2
      %s25 = sadd.s32 %s18, 1
      %s26 = ssub.s32 %s18, %s25
      %p27 = scmp.eq.s32.totalorder %s26, 0
      %s29 = sadd.s32 %s28, 1
      %s30 = scalar_select %p27, %s28, %s29
      %p33 = pneg %p27
      %p34 = scmp.eq.s32.totalorder %s18, 1
      %p35 = por %p33, %p34
      %p36 = scmp.ne.s32.totalorder %s28, %s31
      %p37 = scmp.eq.s32.totalorder %s18, 0
      %p38 = por %p36, %p37
      %p39 = scmp.ne.s32.totalorder %s28, %s31
      %p40 = scmp.eq.s32.totalorder %s23, 1
      %p41 = por %p39, %p40
      %p42 = scmp.ne.s32.totalorder %s31, %s32
      %p43 = scmp.eq.s32.totalorder %s23, 0
      %p44 = por %p42, %p43
      %p45 = scmp.ne.s32.totalorder %s31, %s32
      %p46 = scmp.eq.s32.totalorder %s24, 1
      %p47 = por %p45, %p46
      %p49 = scmp.ne.s32.totalorder %s32, %s48
      %p50 = scmp.eq.s32.totalorder %s24, 0
      %p51 = por %p49, %p50
      %s53 = sadd.s32 %s52, 1
      %p56 = scmp.eq.s32.totalorder %s18, 1
      %p57 = scmp.ne.s32.totalorder %s52, %s54
      %p58 = scmp.eq.s32.totalorder %s18, 0
      %p59 = por %p57, %p58
      %p60 = scmp.ne.s32.totalorder %s52, %s54
      %p61 = scmp.eq.s32.totalorder %s23, 1
      %p62 = por %p60, %p61
      %p63 = scmp.ne.s32.totalorder %s54, %s55
      %p64 = scmp.eq.s32.totalorder %s23, 0
      %p65 = por %p63, %p64
      %p66 = scmp.ne.s32.totalorder %s54, %s55
      %p67 = scmp.eq.s32.totalorder %s24, 1
      %p68 = por %p66, %p67
      %p70 = scmp.ne.s32.totalorder %s55, %s69
      %p71 = scmp.eq.s32.totalorder %s24, 0
      %p72 = por %p70, %p71
      %s74 = sadd.s32 %s73, 1
      %p77 = scmp.eq.s32.totalorder %s18, 1
      %p78 = scmp.ne.s32.totalorder %s73, %s75
      %p79 = scmp.eq.s32.totalorder %s18, 0
      %p80 = por %p78, %p79
      %p81 = scmp.ne.s32.totalorder %s73, %s75
      %p82 = scmp.eq.s32.totalorder %s23, 1
      %p83 = por %p81, %p82
      %p84 = scmp.ne.s32.totalorder %s75, %s76
      %p85 = scmp.eq.s32.totalorder %s23, 0
      %p86 = por %p84, %p85
      %p87 = scmp.ne.s32.totalorder %s75, %s76
      %p88 = scmp.eq.s32.totalorder %s24, 1
      %p89 = por %p87, %p88
      %p91 = scmp.ne.s32.totalorder %s76, %s90
      %p92 = scmp.eq.s32.totalorder %s24, 0
      %p93 = por %p91, %p92
      %s95 = sadd.s32 %s94, 1
      %p98 = scmp.eq.s32.totalorder %s18, 1
      %p99 = scmp.ne.s32.totalorder %s94, %s96
      %p100 = scmp.eq.s32.totalorder %s18, 0
      %p101 = por %p99, %p100
      %p102 = scmp.ne.s32.totalorder %s94, %s96
      %p103 = scmp.eq.s32.totalorder %s23, 1
      %p104 = por %p102, %p103
      %p105 = scmp.ne.s32.totalorder %s96, %s97
      %p106 = scmp.eq.s32.totalorder %s23, 0
      %p107 = por %p105, %p106
      %p108 = scmp.ne.s32.totalorder %s96, %s97
      %p109 = scmp.eq.s32.totalorder %s24, 1
      %p110 = por %p108, %p109
      %p112 = scmp.ne.s32.totalorder %s97, %s111
      %p113 = scmp.eq.s32.totalorder %s24, 0
      %p114 = por %p112, %p113
      %s116 = sadd.s32 %s115, 1
      %p119 = scmp.eq.s32.totalorder %s18, 1
      %p120 = scmp.ne.s32.totalorder %s115, %s117
      %p121 = scmp.eq.s32.totalorder %s18, 0
      %p122 = por %p120, %p121
      %p123 = scmp.ne.s32.totalorder %s115, %s117
      %p124 = scmp.eq.s32.totalorder %s23, 1
      %p125 = por %p123, %p124
      %p126 = scmp.ne.s32.totalorder %s117, %s118
      %p127 = scmp.eq.s32.totalorder %s23, 0
      %p128 = por %p126, %p127
      %p129 = scmp.ne.s32.totalorder %s117, %s118
      %p130 = scmp.eq.s32.totalorder %s24, 1
      %p131 = por %p129, %p130
      %p133 = scmp.ne.s32.totalorder %s118, %s132
      %p134 = scmp.eq.s32.totalorder %s24, 0
      %p135 = por %p133, %p134
      %s137 = sadd.s32 %s136, 1
      %p140 = scmp.eq.s32.totalorder %s18, 1
      %p141 = scmp.ne.s32.totalorder %s136, %s138
      %p142 = scmp.eq.s32.totalorder %s18, 0
      %p143 = por %p141, %p142
      %p144 = scmp.ne.s32.totalorder %s136, %s138
      %p145 = scmp.eq.s32.totalorder %s23, 1
      %p146 = por %p144, %p145
      %p147 = scmp.ne.s32.totalorder %s138, %s139
      %p148 = scmp.eq.s32.totalorder %s23, 0
      %p149 = por %p147, %p148
      %p150 = scmp.ne.s32.totalorder %s138, %s139
      %p151 = scmp.eq.s32.totalorder %s24, 1
      %p152 = por %p150, %p151
      %p154 = scmp.ne.s32.totalorder %s139, %s153
      %p155 = scmp.eq.s32.totalorder %s24, 0
      %p156 = por %p154, %p155
      %s158 = sadd.s32 %s157, 1
      %p161 = scmp.eq.s32.totalorder %s18, 1
      %p162 = scmp.ne.s32.totalorder %s157, %s159
      %p163 = scmp.eq.s32.totalorder %s18, 0
      %p164 = por %p162, %p163
      %p165 = scmp.ne.s32.totalorder %s157, %s159
      %p166 = scmp.eq.s32.totalorder %s23, 1
      %p167 = por %p165, %p166
      %p168 = scmp.ne.s32.totalorder %s159, %s160
      %p169 = scmp.eq.s32.totalorder %s23, 0
      %p170 = por %p168, %p169
      %p171 = scmp.ne.s32.totalorder %s159, %s160
      %p172 = scmp.eq.s32.totalorder %s24, 1
      %p173 = por %p171, %p172
      %p175 = scmp.ne.s32.totalorder %s160, %s174
      %p176 = scmp.eq.s32.totalorder %s24, 0
      %p177 = por %p175, %p176
      %s179 = sadd.s32 %s178, 1
      %p182 = scmp.eq.s32.totalorder %s18, 1
      %p183 = scmp.ne.s32.totalorder %s178, %s180
      %p184 = scmp.eq.s32.totalorder %s18, 0
      %p185 = por %p183, %p184
      %p186 = scmp.ne.s32.totalorder %s178, %s180
      %p187 = scmp.eq.s32.totalorder %s23, 1
      %p188 = por %p186, %p187
      %p189 = scmp.ne.s32.totalorder %s180, %s181
      %p190 = scmp.eq.s32.totalorder %s23, 0
      %p191 = por %p189, %p190
      %p192 = scmp.ne.s32.totalorder %s180, %s181
      %p193 = scmp.eq.s32.totalorder %s24, 1
      %p194 = por %p192, %p193
      %p196 = scmp.ne.s32.totalorder %s181, %s195
      %p197 = scmp.eq.s32.totalorder %s24, 0
      %p198 = por %p196, %p197
      %s200 = sadd.s32 %s199, 1
      %p203 = scmp.eq.s32.totalorder %s18, 1
      %p204 = scmp.ne.s32.totalorder %s199, %s201
      %p205 = scmp.eq.s32.totalorder %s18, 0
      %p206 = por %p204, %p205
      %p207 = scmp.ne.s32.totalorder %s199, %s201
      %p208 = scmp.eq.s32.totalorder %s23, 1
      %p209 = por %p207, %p208
      %p210 = scmp.ne.s32.totalorder %s201, %s202
      %p211 = scmp.eq.s32.totalorder %s23, 0
      %p212 = por %p210, %p211
      %p213 = scmp.ne.s32.totalorder %s201, %s202
      %p214 = scmp.eq.s32.totalorder %s24, 1
      %p215 = por %p213, %p214
      %p217 = scmp.ne.s32.totalorder %s202, %s216
      %p218 = scmp.eq.s32.totalorder %s24, 0
      %p219 = por %p217, %p218
      %s220 = ssub.s32 %s18, %s25
      %p221 = scmp.eq.s32.totalorder %s220, 0
      %s223 = sadd.s32 %s222, 1
      %s224 = scalar_select %p221, %s222, %s223
      %p227 = pneg %p221
      %p228 = scmp.eq.s32.totalorder %s18, 1
      %p229 = por %p227, %p228
      %p230 = scmp.ne.s32.totalorder %s222, %s225
      %p231 = scmp.eq.s32.totalorder %s18, 0
      %p232 = por %p230, %p231
      %p233 = scmp.ne.s32.totalorder %s222, %s225
      %p234 = scmp.eq.s32.totalorder %s23, 1
      %p235 = por %p233, %p234
      %p236 = scmp.ne.s32.totalorder %s225, %s226
      %p237 = scmp.eq.s32.totalorder %s23, 0
      %p238 = por %p236, %p237
      %p239 = scmp.ne.s32.totalorder %s225, %s226
      %p240 = scmp.eq.s32.totalorder %s24, 1
      %p241 = por %p239, %p240
      %p243 = scmp.ne.s32.totalorder %s226, %s242
      %p244 = scmp.eq.s32.totalorder %s24, 0
      %p245 = por %p243, %p244
      %p246 = scmp.le.s32.totalorder 1, %s18
      %p247 = scmp.lt.s32.totalorder %s18, 3
      %p248 = pnand %p246, %p247
      %p249 = pneg %p248
      // Predicated region
      $region9: #{tpu_custom_call.1} parent=5 // pred_check
        _
      $region10: #{tpu_custom_call.1} parent=5 // pred_check_branch
        %251 = sbr.rel (%p248) target = $region12
      $region11: #{tpu_custom_call.1} parent=5 // pred_region
        %s252 = ssub.s32 %s18, 1
        // Predicated region
        $region13: #{tpu_custom_call.1} parent=11 // pred_check
          %p253 = pneg %p65
        $region14: #{tpu_custom_call.1} parent=11 // pred_check_branch
          %255 = sbr.rel (%p253) target = $region16
        $region15: #{tpu_custom_call.1} parent=11 // pred_region
          _
        $region16: #{tpu_custom_call.1} parent=11 // pred_fallthru
          _
        // Predicated region
        $region17: #{tpu_custom_call.1} parent=11 // pred_check
          %p256 = pneg %p86
        $region18: #{tpu_custom_call.1} parent=11 // pred_check_branch
          %258 = sbr.rel (%p256) target = $region20
        $region19: #{tpu_custom_call.1} parent=11 // pred_region
          _
        $region20: #{tpu_custom_call.1} parent=11 // pred_fallthru
          _
        // Predicated region
        $region21: #{tpu_custom_call.1} parent=11 // pred_check
          %p259 = pneg %p107
        $region22: #{tpu_custom_call.1} parent=11 // pred_check_branch
          %261 = sbr.rel (%p259) target = $region24
        $region23: #{tpu_custom_call.1} parent=11 // pred_region
          _
        $region24: #{tpu_custom_call.1} parent=11 // pred_fallthru
          _
        // Predicated region
        $region25: #{tpu_custom_call.1} parent=11 // pred_check
          %p262 = pneg %p128
        $region26: #{tpu_custom_call.1} parent=11 // pred_check_branch
          %264 = sbr.rel (%p262) target = $region28
        $region27: #{tpu_custom_call.1} parent=11 // pred_region
          _
        $region28: #{tpu_custom_call.1} parent=11 // pred_fallthru
          _
        // Predicated region
        $region29: #{tpu_custom_call.1} parent=11 // pred_check
          %p265 = pneg %p149
        $region30: #{tpu_custom_call.1} parent=11 // pred_check_branch
          %267 = sbr.rel (%p265) target = $region32
        $region31: #{tpu_custom_call.1} parent=11 // pred_region
          _
        $region32: #{tpu_custom_call.1} parent=11 // pred_fallthru
          _
        // Predicated region
        $region33: #{tpu_custom_call.1} parent=11 // pred_check
          %p268 = pneg %p170
        $region34: #{tpu_custom_call.1} parent=11 // pred_check_branch
          %270 = sbr.rel (%p268) target = $region36
        $region35: #{tpu_custom_call.1} parent=11 // pred_region
          _
        $region36: #{tpu_custom_call.1} parent=11 // pred_fallthru
          _
        // Predicated region
        $region37: #{tpu_custom_call.1} parent=11 // pred_check
          %p271 = pneg %p191
        $region38: #{tpu_custom_call.1} parent=11 // pred_check_branch
          %273 = sbr.rel (%p271) target = $region40
        $region39: #{tpu_custom_call.1} parent=11 // pred_region
          _
        $region40: #{tpu_custom_call.1} parent=11 // pred_fallthru
          _
        // Predicated region
        $region41: #{tpu_custom_call.1} parent=11 // pred_check
          %p274 = pneg %p212
        $region42: #{tpu_custom_call.1} parent=11 // pred_check_branch
          %276 = sbr.rel (%p274) target = $region44
        $region43: #{tpu_custom_call.1} parent=11 // pred_region
          _
        $region44: #{tpu_custom_call.1} parent=11 // pred_fallthru
          _
      $region12: #{tpu_custom_call.1} parent=5 // pred_fallthru
        _
      %p277 = scmp.lt.s32.totalorder %s18, 2
      // Predicated region
      $region45: #{tpu_custom_call.1} parent=5 // pred_check
        %p278 = pneg %p277
      $region46: #{tpu_custom_call.1} parent=5 // pred_check_branch
        %280 = sbr.rel (%p278) target = $region48
      $region47: #{tpu_custom_call.1} parent=5 // pred_region
        // Predicated region
        $region49: #{tpu_custom_call.1} parent=47 // pred_check
          %p281 = pneg %p38
        $region50: #{tpu_custom_call.1} parent=47 // pred_check_branch
          %283 = sbr.rel (%p281) target = $region52
        $region51: #{tpu_custom_call.1} parent=47 // pred_region
          %p284 = scmp.lt.s32.totalorder %s18, 1
          %s285 = scalar_select %p284, %s18, 1
          %s286 = smul.addr %s285, 2
          %s287 = smul.addr %s286, 8
          %s288 = scalar_lea.vmem %s0, %s287
        $region52: #{tpu_custom_call.1} parent=47 // pred_fallthru
          _
      $region48: #{tpu_custom_call.1} parent=5 // pred_fallthru
        _
      %p289 = scmp.le.s32.totalorder 1, %s18
      %p290 = scmp.lt.s32.totalorder %s18, 3
      %p291 = pnand %p289, %p290
      %p292 = pneg %p291
      // Predicated region
      $region53: #{tpu_custom_call.1} parent=5 // pred_check
        _
      $region54: #{tpu_custom_call.1} parent=5 // pred_check_branch
        %294 = sbr.rel (%p291) target = $region56
      $region55: #{tpu_custom_call.1} parent=5 // pred_region
        %s295 = ssub.s32 %s18, 1
        %p296 = scmp.lt.s32.totalorder %s23, 1
        %s297 = scalar_select %p296, %s23, 1
        %s298 = smul.addr %s297, 2
        %s299 = smul.addr %s298, 8
        %s300 = scalar_lea.vmem %s0, %s299
        %p301 = pneg %p44
        %p302 = pneg %p41
        %p303 = pneg %p65
        %p304 = pneg %p62
        %p305 = pneg %p86
        %p306 = pneg %p83
        %p307 = pneg %p107
        %p308 = pneg %p104
        %p309 = pneg %p128
        %p310 = pneg %p125
        %p311 = pneg %p149
        %p312 = pneg %p146
        %p313 = pneg %p170
        %p314 = pneg %p167
        %p315 = pneg %p191
        %p316 = pneg %p188
        %p317 = pneg %p212
        %p318 = pneg %p209
        %p319 = pneg %p238
        %p320 = pneg %p235
        %s321 = sand.u32 %s225, 1
        %s322 = scalar_lea.sflag [#allocation3], %s321
        %s323 = sand.u32 %s225, 1
        %s324 = smul.addr %s323, 16
        %s325 = scalar_lea.vmem [#allocation2], %s324
        %p326 = scmp.lt.s32.totalorder %s23, 1
        %s327 = scalar_select %p326, %s23, 1
        %s328 = smul.addr %s327, 2
        %s329 = smul.addr %s328, 8
        %s330 = scalar_lea.vmem %s0, %s329
        %v332 = vld [vmem:[%s330] sm:$0xff]
        %v333 = vld [vmem:[%s330 + $0x8] sm:$0xff]
        %v334 = vld [vmem:[%s1] sm:$0xf]
        %v335 = vld [vmem:[%s1 + $0x4] sm:$0xf]
        %v336 = vld [vmem:[%s1 + $0x8] sm:$0xf]
        %v337 = vld [vmem:[%s1 + $0xc] sm:$0xf]
        %v338 = vpack.c.bf16 %v332, %v332
        %v339 = vpack.c.bf16 %v333, %v333
        %v340 = vld [vmem:[%s2] sm:$0xff]
        %v341 = vld [vmem:[%s2 + $0x8] sm:$0xff]
        %v342 = vld [vmem:[%s2 + $0x10] sm:$0xff]
        %v343 = vld [vmem:[%s2 + $0x18] sm:$0xff]
        %345 = vset.pattern.permute.xlu0 0
        %346 = vperm.xlu0 %345, %v340
        %v347 = vpop.permute.xlu0 %346
        %350 = vset.pattern.permute.xlu0 0
        %351 = vperm.xlu0 %350, %v341
        %v352 = vpop.permute.xlu0 %351
        %355 = vset.pattern.permute.xlu0 0
        %356 = vperm.xlu0 %355, %v342
        %v357 = vpop.permute.xlu0 %356
        %360 = vset.pattern.permute.xlu0 0
        %361 = vperm.xlu0 %360, %v343
        %v362 = vpop.permute.xlu0 %361
        %v368 = vunpack.c.l.b16 %v334
        %v369 = vunpack.c.l.b16 %v335
        %v370 = vunpack.c.l.b16 %v336
        %v371 = vunpack.c.l.b16 %v337
        %v372 = vpack.c.b16 %v369, %v368
        %v373 = vpack.c.b16 %v371, %v370
        %vm374 = vcmask 64512
        %v376 = vsel %vm374, %v372, 0
        %v379 = vsel %vm374, %v373, 0
        %vm381 = vcmask 1043456
        %v383 = vsel %vm381, %v338, 0
        %v386 = vsel %vm381, %v339, 0
        %388 = vmatpush.bf16.msra.mxu0 0
        %389 = vmatpush.bf16.msra.mxu0 0
        %390 = vmatpush.bf16.msra.mxu0 0
        %391 = vmatpush.bf16.msra.mxu0 0
        %392 = vmatpush.bf16.msra.mxu0 0
        %393 = vmatpush.bf16.msra.mxu0 0
        %394 = vmatpush.bf16.msra.mxu0 0
        %395 = vmatpush.bf16.msra.mxu0 %v383
        %396 = vmatmul.bf16.gmra.mxu0 %v376
        %v397 = vpop.f32.mrf.mxu0
        %v398 = vadd.f32 %v347, %v397
        %v399 = vpop.f32.mrf.mxu0
        %v400 = vadd.f32 %v352, %v399
        %401 = vmatmul.bf16.gmra.mxu0 %v379
        %v402 = vpop.f32.mrf.mxu0
        %v403 = vadd.f32 %v357, %v402
        %v404 = vpop.f32.mrf.mxu0
        %v405 = vadd.f32 %v362, %v404
        %406 = vdwg.mxu0
        %407 = vmatpush.bf16.msra.mxu0 0
        %408 = vmatpush.bf16.msra.mxu0 0
        %409 = vmatpush.bf16.msra.mxu0 0
        %410 = vmatpush.bf16.msra.mxu0 0
        %411 = vmatpush.bf16.msra.mxu0 0
        %412 = vmatpush.bf16.msra.mxu0 0
        %413 = vmatpush.bf16.msra.mxu0 0
        %414 = vmatpush.bf16.msra.mxu0 %v386
        %415 = vmatmul.bf16.gmra.mxu0 %v376
        %v416 = vpop.f32.mrf.mxu0
        %v417 = vadd.f32 %v347, %v416
        %v418 = vpop.f32.mrf.mxu0
        %v419 = vadd.f32 %v352, %v418
        %420 = vmatmul.bf16.gmra.mxu0 %v379
        %v421 = vpop.f32.mrf.mxu0
        %v422 = vadd.f32 %v357, %v421
        %v423 = vpop.f32.mrf.mxu0
        %v424 = vadd.f32 %v362, %v423
        %425 = vdwg.mxu0
        %v426 = vxor.u32 %v398, 2147483648
        %v427 = vxor.u32 %v417, 2147483648
        %v428 = vxor.u32 %v400, 2147483648
        %v429 = vxor.u32 %v419, 2147483648
        %v430 = vxor.u32 %v403, 2147483648
        %v431 = vxor.u32 %v422, 2147483648
        %v432 = vxor.u32 %v405, 2147483648
        %v433 = vxor.u32 %v424, 2147483648
        %v434 = vmul.f32 %v426, 1.442695
        %v435 = vpow.pop %v434
        %v436 = vmul.f32 %v427, 1.442695
        %v437 = vpow.pop %v436
        %v438 = vmul.f32 %v428, 1.442695
        %v439 = vpow.pop %v438
        %v440 = vmul.f32 %v429, 1.442695
        %v441 = vpow.pop %v440
        %v442 = vmul.f32 %v430, 1.442695
        %v443 = vpow.pop %v442
        %v444 = vmul.f32 %v431, 1.442695
        %v445 = vpow.pop %v444
        %v446 = vmul.f32 %v432, 1.442695
        %v447 = vpow.pop %v446
        %v448 = vmul.f32 %v433, 1.442695
        %v449 = vpow.pop %v448
        %v450 = vadd.f32 %v435, 1.0
        %v451 = vadd.f32 %v437, 1.0
        %v452 = vadd.f32 %v439, 1.0
        %v453 = vadd.f32 %v441, 1.0
        %v454 = vadd.f32 %v443, 1.0
        %v455 = vadd.f32 %v445, 1.0
        %v456 = vadd.f32 %v447, 1.0
        %v457 = vadd.f32 %v449, 1.0
        %v458 = vrcp.pop %v450
        %v459 = vmul.f32 %v450, %v458
        %v460 = vsub.f32 1.0, %v459
        %v461 = vmul.f32 %v458, %v460
        %v462 = vadd.f32 %v458, %v461
        %vm463 = vweird.f32 %v450
        %vm464 = vweird.f32 %v458
        %vm465 = vmor %vm463, %vm464
        %v466 = vsel %vm465, %v458, %v462
        %v467 = vand.u32 2147483647, %v450
        %vm468 = vcmp.eq.f32.partialorder %v467, 8.507059e+37
        %v469 = vand.u32 %v450, 2147483648
        %v470 = vor.u32 1.1754944e-38, %v469
        %v471 = vsel %vm468, %v470, %v466
        %v472 = vmul.f32 1.0, %v471
        %v473 = vrcp.pop %v451
        %v474 = vmul.f32 %v451, %v473
        %v475 = vsub.f32 1.0, %v474
        %v476 = vmul.f32 %v473, %v475
        %v477 = vadd.f32 %v473, %v476
        %vm478 = vweird.f32 %v451
        %vm479 = vweird.f32 %v473
        %vm480 = vmor %vm478, %vm479
        %v481 = vsel %vm480, %v473, %v477
        %v482 = vand.u32 2147483647, %v451
        %vm483 = vcmp.eq.f32.partialorder %v482, 8.507059e+37
        %v484 = vand.u32 %v451, 2147483648
        %v485 = vor.u32 1.1754944e-38, %v484
        %v486 = vsel %vm483, %v485, %v481
        %v487 = vmul.f32 1.0, %v486
        %v488 = vrcp.pop %v452
        %v489 = vmul.f32 %v452, %v488
        %v490 = vsub.f32 1.0, %v489
        %v491 = vmul.f32 %v488, %v490
        %v492 = vadd.f32 %v488, %v491
        %vm493 = vweird.f32 %v452
        %vm494 = vweird.f32 %v488
        %vm495 = vmor %vm493, %vm494
        %v496 = vsel %vm495, %v488, %v492
        %v497 = vand.u32 2147483647, %v452
        %vm498 = vcmp.eq.f32.partialorder %v497, 8.507059e+37
        %v499 = vand.u32 %v452, 2147483648
        %v500 = vor.u32 1.1754944e-38, %v499
        %v501 = vsel %vm498, %v500, %v496
        %v502 = vmul.f32 1.0, %v501
        %v503 = vrcp.pop %v453
        %v504 = vmul.f32 %v453, %v503
        %v505 = vsub.f32 1.0, %v504
        %v506 = vmul.f32 %v503, %v505
        %v507 = vadd.f32 %v503, %v506
        %vm508 = vweird.f32 %v453
        %vm509 = vweird.f32 %v503
        %vm510 = vmor %vm508, %vm509
        %v511 = vsel %vm510, %v503, %v507
        %v512 = vand.u32 2147483647, %v453
        %vm513 = vcmp.eq.f32.partialorder %v512, 8.507059e+37
        %v514 = vand.u32 %v453, 2147483648
        %v515 = vor.u32 1.1754944e-38, %v514
        %v516 = vsel %vm513, %v515, %v511
        %v517 = vmul.f32 1.0, %v516
        %v518 = vrcp.pop %v454
        %v519 = vmul.f32 %v454, %v518
        %v520 = vsub.f32 1.0, %v519
        %v521 = vmul.f32 %v518, %v520
        %v522 = vadd.f32 %v518, %v521
        %vm523 = vweird.f32 %v454
        %vm524 = vweird.f32 %v518
        %vm525 = vmor %vm523, %vm524
        %v526 = vsel %vm525, %v518, %v522
        %v527 = vand.u32 2147483647, %v454
        %vm528 = vcmp.eq.f32.partialorder %v527, 8.507059e+37
        %v529 = vand.u32 %v454, 2147483648
        %v530 = vor.u32 1.1754944e-38, %v529
        %v531 = vsel %vm528, %v530, %v526
        %v532 = vmul.f32 1.0, %v531
        %v533 = vrcp.pop %v455
        %v534 = vmul.f32 %v455, %v533
        %v535 = vsub.f32 1.0, %v534
        %v536 = vmul.f32 %v533, %v535
        %v537 = vadd.f32 %v533, %v536
        %vm538 = vweird.f32 %v455
        %vm539 = vweird.f32 %v533
        %vm540 = vmor %vm538, %vm539
        %v541 = vsel %vm540, %v533, %v537
        %v542 = vand.u32 2147483647, %v455
        %vm543 = vcmp.eq.f32.partialorder %v542, 8.507059e+37
        %v544 = vand.u32 %v455, 2147483648
        %v545 = vor.u32 1.1754944e-38, %v544
        %v546 = vsel %vm543, %v545, %v541
        %v547 = vmul.f32 1.0, %v546
        %v548 = vrcp.pop %v456
        %v549 = vmul.f32 %v456, %v548
        %v550 = vsub.f32 1.0, %v549
        %v551 = vmul.f32 %v548, %v550
        %v552 = vadd.f32 %v548, %v551
        %vm553 = vweird.f32 %v456
        %vm554 = vweird.f32 %v548
        %vm555 = vmor %vm553, %vm554
        %v556 = vsel %vm555, %v548, %v552
        %v557 = vand.u32 2147483647, %v456
        %vm558 = vcmp.eq.f32.partialorder %v557, 8.507059e+37
        %v559 = vand.u32 %v456, 2147483648
        %v560 = vor.u32 1.1754944e-38, %v559
        %v561 = vsel %vm558, %v560, %v556
        %v562 = vmul.f32 1.0, %v561
        %v563 = vrcp.pop %v457
        %v564 = vmul.f32 %v457, %v563
        %v565 = vsub.f32 1.0, %v564
        %v566 = vmul.f32 %v563, %v565
        %v567 = vadd.f32 %v563, %v566
        %vm568 = vweird.f32 %v457
        %vm569 = vweird.f32 %v563
        %vm570 = vmor %vm568, %vm569
        %v571 = vsel %vm570, %v563, %v567
        %v572 = vand.u32 2147483647, %v457
        %vm573 = vcmp.eq.f32.partialorder %v572, 8.507059e+37
        %v574 = vand.u32 %v457, 2147483648
        %v575 = vor.u32 1.1754944e-38, %v574
        %v576 = vsel %vm573, %v575, %v571
        %v577 = vmul.f32 1.0, %v576
        %v578 = vmul.f32 %v398, %v472
        %v579 = vmul.f32 %v417, %v487
        %v580 = vmul.f32 %v400, %v502
        %v581 = vmul.f32 %v419, %v517
        %v582 = vmul.f32 %v403, %v532
        %v583 = vmul.f32 %v422, %v547
        %v584 = vmul.f32 %v405, %v562
        %v585 = vmul.f32 %v424, %v577
        %v586 = vlaneseq
        %v587 = vand.u32 %v586, 127
        %v588 = vadd.s32 %v587, 128
        %v589 = vand.u32 %v587, 15
        %v590 = vand.u32 %v588, 15
        %vm591 = vcmp.eq.s32.totalorder %v589, 0
        %vm592 = vcmp.eq.s32.totalorder %v590, 0
        %vm593 = vcmp.eq.s32.totalorder %v589, 15
        %vm594 = vcmp.eq.s32.totalorder %v590, 15
        %vm595 = vcmp.lt.s32.totalorder %v587, 16
        %vm596 = vcmp.lt.s32.totalorder %v588, 16
        %vm597 = vcmp.ge.s32.totalorder %v587, 240
        %vm598 = vcmp.ge.s32.totalorder %v588, 240
        %599 = vrot.lane.b32.xlu0 %v578, 127
        %v600 = vpop.permute.xlu0 %599
        %601 = vrot.lane.b32.xlu0 %v580, 127
        %v602 = vpop.permute.xlu0 %601
        %603 = vrot.lane.b32.xlu0 %v582, 127
        %v604 = vpop.permute.xlu0 %603
        %605 = vrot.lane.b32.xlu0 %v584, 127
        %v606 = vpop.permute.xlu0 %605
        %607 = vrot.lane.b32.xlu0 %v579, 127
        %v608 = vpop.permute.xlu0 %607
        %609 = vrot.lane.b32.xlu0 %v581, 127
        %v610 = vpop.permute.xlu0 %609
        %611 = vrot.lane.b32.xlu0 %v583, 127
        %v612 = vpop.permute.xlu0 %611
        %613 = vrot.lane.b32.xlu0 %v585, 127
        %v614 = vpop.permute.xlu0 %613
        %vm615 = vcmp.lt.s32.totalorder %v587, 127
        %v616 = vsel %vm615, %v600, %v608
        %v617 = vsel %vm615, %v602, %v610
        %v618 = vsel %vm615, %v604, %v612
        %v619 = vsel %vm615, %v606, %v614
        %v620 = vsel %vm615, %v608, %v600
        %v621 = vsel %vm615, %v610, %v602
        %v622 = vsel %vm615, %v612, %v604
        %v623 = vsel %vm615, %v614, %v606
        %v624 = vsel %vm593, 1, 0
        %v625 = vsel %vm594, 1, 0
        %vm626 = vcmp.eq.s32.totalorder %v624, 1
        %vm627 = vcmp.eq.s32.totalorder %v625, 1
        %v628 = vsel %vm626, %v578, %v616
        %v629 = vsel %vm627, %v579, %v620
        %v630 = vsel %vm626, %v580, %v617
        %v631 = vsel %vm627, %v581, %v621
        %v632 = vsel %vm626, %v582, %v618
        %v633 = vsel %vm627, %v583, %v622
        %v634 = vsel %vm626, %v584, %v619
        %v635 = vsel %vm627, %v585, %v623
        %636 = vrot.lane.b32.xlu0 %v628, 127
        %v637 = vpop.permute.xlu0 %636
        %638 = vrot.lane.b32.xlu0 %v630, 127
        %v639 = vpop.permute.xlu0 %638
        %640 = vrot.lane.b32.xlu0 %v632, 127
        %v641 = vpop.permute.xlu0 %640
        %642 = vrot.lane.b32.xlu0 %v634, 127
        %v643 = vpop.permute.xlu0 %642
        %644 = vrot.lane.b32.xlu0 %v629, 127
        %v645 = vpop.permute.xlu0 %644
        %646 = vrot.lane.b32.xlu0 %v631, 127
        %v647 = vpop.permute.xlu0 %646
        %648 = vrot.lane.b32.xlu0 %v633, 127
        %v649 = vpop.permute.xlu0 %648
        %650 = vrot.lane.b32.xlu0 %v635, 127
        %v651 = vpop.permute.xlu0 %650
        %v652 = vsel %vm615, %v637, %v645
        %v653 = vsel %vm615, %v639, %v647
        %v654 = vsel %vm615, %v641, %v649
        %v655 = vsel %vm615, %v643, %v651
        %v656 = vsel %vm615, %v645, %v637
        %v657 = vsel %vm615, %v647, %v639
        %v658 = vsel %vm615, %v649, %v641
        %v659 = vsel %vm615, %v651, %v643
        %v660 = vsel %vm626, %v578, %v652
        %v661 = vsel %vm627, %v579, %v656
        %v662 = vsel %vm626, %v580, %v653
        %v663 = vsel %vm627, %v581, %v657
        %v664 = vsel %vm626, %v582, %v654
        %v665 = vsel %vm627, %v583, %v658
        %v666 = vsel %vm626, %v584, %v655
        %v667 = vsel %vm627, %v585, %v659
        %668 = vrot.lane.b32.xlu0 %v578, 1
        %v669 = vpop.permute.xlu0 %668
        %670 = vrot.lane.b32.xlu0 %v580, 1
        %v671 = vpop.permute.xlu0 %670
        %672 = vrot.lane.b32.xlu0 %v582, 1
        %v673 = vpop.permute.xlu0 %672
        %674 = vrot.lane.b32.xlu0 %v584, 1
        %v675 = vpop.permute.xlu0 %674
        %676 = vrot.lane.b32.xlu0 %v579, 1
        %v677 = vpop.permute.xlu0 %676
        %678 = vrot.lane.b32.xlu0 %v581, 1
        %v679 = vpop.permute.xlu0 %678
        %680 = vrot.lane.b32.xlu0 %v583, 1
        %v681 = vpop.permute.xlu0 %680
        %682 = vrot.lane.b32.xlu0 %v585, 1
        %v683 = vpop.permute.xlu0 %682
        %vm684 = vcmp.lt.s32.totalorder %v587, 1
        %v685 = vsel %vm684, %v669, %v677
        %v686 = vsel %vm684, %v671, %v679
        %v687 = vsel %vm684, %v673, %v681
        %v688 = vsel %vm684, %v675, %v683
        %v689 = vsel %vm684, %v677, %v669
        %v690 = vsel %vm684, %v679, %v671
        %v691 = vsel %vm684, %v681, %v673
        %v692 = vsel %vm684, %v683, %v675
        %v693 = vsel %vm591, 1, 0
        %v694 = vsel %vm592, 1, 0
        %vm695 = vcmp.eq.s32.totalorder %v693, 1
        %vm696 = vcmp.eq.s32.totalorder %v694, 1
        %v697 = vsel %vm695, %v578, %v689
        %v698 = vsel %vm696, %v579, %v685
        %v699 = vsel %vm695, %v580, %v690
        %v700 = vsel %vm696, %v581, %v686
        %v701 = vsel %vm695, %v582, %v691
        %v702 = vsel %vm696, %v583, %v687
        %v703 = vsel %vm695, %v584, %v692
        %v704 = vsel %vm696, %v585, %v688
        %705 = vrot.lane.b32.xlu0 %v697, 1
        %v706 = vpop.permute.xlu0 %705
        %707 = vrot.lane.b32.xlu0 %v699, 1
        %v708 = vpop.permute.xlu0 %707
        %709 = vrot.lane.b32.xlu0 %v701, 1
        %v710 = vpop.permute.xlu0 %709
        %711 = vrot.lane.b32.xlu0 %v703, 1
        %v712 = vpop.permute.xlu0 %711
        %713 = vrot.lane.b32.xlu0 %v698, 1
        %v714 = vpop.permute.xlu0 %713
        %715 = vrot.lane.b32.xlu0 %v700, 1
        %v716 = vpop.permute.xlu0 %715
        %717 = vrot.lane.b32.xlu0 %v702, 1
        %v718 = vpop.permute.xlu0 %717
        %719 = vrot.lane.b32.xlu0 %v704, 1
        %v720 = vpop.permute.xlu0 %719
        %v721 = vsel %vm684, %v706, %v714
        %v722 = vsel %vm684, %v708, %v716
        %v723 = vsel %vm684, %v710, %v718
        %v724 = vsel %vm684, %v712, %v720
        %v725 = vsel %vm684, %v714, %v706
        %v726 = vsel %vm684, %v716, %v708
        %v727 = vsel %vm684, %v718, %v710
        %v728 = vsel %vm684, %v720, %v712
        %v729 = vsel %vm695, %v578, %v725
        %v730 = vsel %vm696, %v579, %v721
        %v731 = vsel %vm695, %v580, %v726
        %v732 = vsel %vm696, %v581, %v722
        %v733 = vsel %vm695, %v582, %v727
        %v734 = vsel %vm696, %v583, %v723
        %v735 = vsel %vm695, %v584, %v728
        %v736 = vsel %vm696, %v585, %v724
        %v737 = vld [vmem:[%s3] sm:$0xff]
        %v738 = vld [vmem:[%s3 + $0x8] sm:$0xff]
        %v739 = vld [vmem:[%s3 + $0x10] sm:$0xff]
        %v740 = vld [vmem:[%s3 + $0x18] sm:$0xff]
        %742 = vset.pattern.permute.xlu0 0
        %743 = vperm.xlu0 %742, %v737
        %v744 = vpop.permute.xlu0 %743
        %747 = vset.pattern.permute.xlu0 0
        %748 = vperm.xlu0 %747, %v738
        %v749 = vpop.permute.xlu0 %748
        %752 = vset.pattern.permute.xlu0 0
        %753 = vperm.xlu0 %752, %v739
        %v754 = vpop.permute.xlu0 %753
        %757 = vset.pattern.permute.xlu0 0
        %758 = vperm.xlu0 %757, %v740
        %v759 = vpop.permute.xlu0 %758
        %v761 = vmul.f32 %v729, %v744
        %v762 = vmul.f32 %v730, %v744
        %v763 = vmul.f32 %v731, %v749
        %v764 = vmul.f32 %v732, %v749
        %v765 = vmul.f32 %v733, %v754
        %v766 = vmul.f32 %v734, %v754
        %v767 = vmul.f32 %v735, %v759
        %v768 = vmul.f32 %v736, %v759
        %769 = vset.pattern.permute.xlu0 1
        %770 = vperm.xlu0 %769, %v737
        %v771 = vpop.permute.xlu0 %770
        %773 = vset.pattern.permute.xlu0 1
        %774 = vperm.xlu0 %773, %v738
        %v775 = vpop.permute.xlu0 %774
        %777 = vset.pattern.permute.xlu0 1
        %778 = vperm.xlu0 %777, %v739
        %v779 = vpop.permute.xlu0 %778
        %781 = vset.pattern.permute.xlu0 1
        %782 = vperm.xlu0 %781, %v740
        %v783 = vpop.permute.xlu0 %782
        %v785 = vmul.f32 %v697, %v771
        %v786 = vmul.f32 %v698, %v771
        %v787 = vmul.f32 %v699, %v775
        %v788 = vmul.f32 %v700, %v775
        %v789 = vmul.f32 %v701, %v779
        %v790 = vmul.f32 %v702, %v779
        %v791 = vmul.f32 %v703, %v783
        %v792 = vmul.f32 %v704, %v783
        %v793 = vadd.f32 %v761, %v785
        %v794 = vadd.f32 %v762, %v786
        %v795 = vadd.f32 %v763, %v787
        %v796 = vadd.f32 %v764, %v788
        %v797 = vadd.f32 %v765, %v789
        %v798 = vadd.f32 %v766, %v790
        %v799 = vadd.f32 %v767, %v791
        %v800 = vadd.f32 %v768, %v792
        %801 = vset.pattern.permute.xlu0 2
        %802 = vperm.xlu0 %801, %v737
        %v803 = vpop.permute.xlu0 %802
        %805 = vset.pattern.permute.xlu0 2
        %806 = vperm.xlu0 %805, %v738
        %v807 = vpop.permute.xlu0 %806
        %809 = vset.pattern.permute.xlu0 2
        %810 = vperm.xlu0 %809, %v739
        %v811 = vpop.permute.xlu0 %810
        %813 = vset.pattern.permute.xlu0 2
        %814 = vperm.xlu0 %813, %v740
        %v815 = vpop.permute.xlu0 %814
        %v817 = vmul.f32 %v578, %v803
        %v818 = vmul.f32 %v579, %v803
        %v819 = vmul.f32 %v580, %v807
        %v820 = vmul.f32 %v581, %v807
        %v821 = vmul.f32 %v582, %v811
        %v822 = vmul.f32 %v583, %v811
        %v823 = vmul.f32 %v584, %v815
        %v824 = vmul.f32 %v585, %v815
        %v825 = vadd.f32 %v793, %v817
        %v826 = vadd.f32 %v794, %v818
        %v827 = vadd.f32 %v795, %v819
        %v828 = vadd.f32 %v796, %v820
        %v829 = vadd.f32 %v797, %v821
        %v830 = vadd.f32 %v798, %v822
        %v831 = vadd.f32 %v799, %v823
        %v832 = vadd.f32 %v800, %v824
        %833 = vset.pattern.permute.xlu0 3
        %834 = vperm.xlu0 %833, %v737
        %v835 = vpop.permute.xlu0 %834
        %837 = vset.pattern.permute.xlu0 3
        %838 = vperm.xlu0 %837, %v738
        %v839 = vpop.permute.xlu0 %838
        %841 = vset.pattern.permute.xlu0 3
        %842 = vperm.xlu0 %841, %v739
        %v843 = vpop.permute.xlu0 %842
        %845 = vset.pattern.permute.xlu0 3
        %846 = vperm.xlu0 %845, %v740
        %v847 = vpop.permute.xlu0 %846
        %v849 = vmul.f32 %v628, %v835
        %v850 = vmul.f32 %v629, %v835
        %v851 = vmul.f32 %v630, %v839
        %v852 = vmul.f32 %v631, %v839
        %v853 = vmul.f32 %v632, %v843
        %v854 = vmul.f32 %v633, %v843
        %v855 = vmul.f32 %v634, %v847
        %v856 = vmul.f32 %v635, %v847
        %v857 = vadd.f32 %v825, %v849
        %v858 = vadd.f32 %v826, %v850
        %v859 = vadd.f32 %v827, %v851
        %v860 = vadd.f32 %v828, %v852
        %v861 = vadd.f32 %v829, %v853
        %v862 = vadd.f32 %v830, %v854
        %v863 = vadd.f32 %v831, %v855
        %v864 = vadd.f32 %v832, %v856
        %865 = vset.pattern.permute.xlu0 4
        %866 = vperm.xlu0 %865, %v737
        %v867 = vpop.permute.xlu0 %866
        %869 = vset.pattern.permute.xlu0 4
        %870 = vperm.xlu0 %869, %v738
        %v871 = vpop.permute.xlu0 %870
        %873 = vset.pattern.permute.xlu0 4
        %874 = vperm.xlu0 %873, %v739
        %v875 = vpop.permute.xlu0 %874
        %877 = vset.pattern.permute.xlu0 4
        %878 = vperm.xlu0 %877, %v740
        %v879 = vpop.permute.xlu0 %878
        %v881 = vmul.f32 %v660, %v867
        %v882 = vmul.f32 %v661, %v867
        %v883 = vmul.f32 %v662, %v871
        %v884 = vmul.f32 %v663, %v871
        %v885 = vmul.f32 %v664, %v875
        %v886 = vmul.f32 %v665, %v875
        %v887 = vmul.f32 %v666, %v879
        %v888 = vmul.f32 %v667, %v879
        %v889 = vadd.f32 %v857, %v881
        %v890 = vadd.f32 %v858, %v882
        %v891 = vadd.f32 %v859, %v883
        %v892 = vadd.f32 %v860, %v884
        %v893 = vadd.f32 %v861, %v885
        %v894 = vadd.f32 %v862, %v886
        %v895 = vadd.f32 %v863, %v887
        %v896 = vadd.f32 %v864, %v888
        %897 = vrot.lane.b32.xlu0 %v889, 16
        %v898 = vpop.permute.xlu0 %897
        %899 = vrot.lane.b32.xlu0 %v891, 16
        %v900 = vpop.permute.xlu0 %899
        %901 = vrot.lane.b32.xlu0 %v893, 16
        %v902 = vpop.permute.xlu0 %901
        %903 = vrot.lane.b32.xlu0 %v895, 16
        %v904 = vpop.permute.xlu0 %903
        %905 = vrot.lane.b32.xlu0 %v890, 16
        %v906 = vpop.permute.xlu0 %905
        %907 = vrot.lane.b32.xlu0 %v892, 16
        %v908 = vpop.permute.xlu0 %907
        %909 = vrot.lane.b32.xlu0 %v894, 16
        %v910 = vpop.permute.xlu0 %909
        %911 = vrot.lane.b32.xlu0 %v896, 16
        %v912 = vpop.permute.xlu0 %911
        %v913 = vsel %vm595, %v898, %v906
        %v914 = vsel %vm595, %v900, %v908
        %v915 = vsel %vm595, %v902, %v910
        %v916 = vsel %vm595, %v904, %v912
        %v917 = vsel %vm595, %v906, %v898
        %v918 = vsel %vm595, %v908, %v900
        %v919 = vsel %vm595, %v910, %v902
        %v920 = vsel %vm595, %v912, %v904
        %v921 = vsel %vm595, 1, 0
        %v922 = vsel %vm596, 1, 0
        %vm923 = vcmp.eq.s32.totalorder %v921, 1
        %vm924 = vcmp.eq.s32.totalorder %v922, 1
        %v925 = vsel %vm923, %v889, %v917
        %v926 = vsel %vm924, %v890, %v913
        %v927 = vsel %vm923, %v891, %v918
        %v928 = vsel %vm924, %v892, %v914
        %v929 = vsel %vm923, %v893, %v919
        %v930 = vsel %vm924, %v894, %v915
        %v931 = vsel %vm923, %v895, %v920
        %v932 = vsel %vm924, %v896, %v916
        %933 = vrot.lane.b32.xlu0 %v925, 16
        %v934 = vpop.permute.xlu0 %933
        %935 = vrot.lane.b32.xlu0 %v927, 16
        %v936 = vpop.permute.xlu0 %935
        %937 = vrot.lane.b32.xlu0 %v929, 16
        %v938 = vpop.permute.xlu0 %937
        %939 = vrot.lane.b32.xlu0 %v931, 16
        %v940 = vpop.permute.xlu0 %939
        %941 = vrot.lane.b32.xlu0 %v926, 16
        %v942 = vpop.permute.xlu0 %941
        %943 = vrot.lane.b32.xlu0 %v928, 16
        %v944 = vpop.permute.xlu0 %943
        %945 = vrot.lane.b32.xlu0 %v930, 16
        %v946 = vpop.permute.xlu0 %945
        %947 = vrot.lane.b32.xlu0 %v932, 16
        %v948 = vpop.permute.xlu0 %947
        %v949 = vsel %vm595, %v934, %v942
        %v950 = vsel %vm595, %v936, %v944
        %v951 = vsel %vm595, %v938, %v946
        %v952 = vsel %vm595, %v940, %v948
        %v953 = vsel %vm595, %v942, %v934
        %v954 = vsel %vm595, %v944, %v936
        %v955 = vsel %vm595, %v946, %v938
        %v956 = vsel %vm595, %v948, %v940
        %v957 = vsel %vm923, %v889, %v953
        %v958 = vsel %vm924, %v890, %v949
        %v959 = vsel %vm923, %v891, %v954
        %v960 = vsel %vm924, %v892, %v950
        %v961 = vsel %vm923, %v893, %v955
        %v962 = vsel %vm924, %v894, %v951
        %v963 = vsel %vm923, %v895, %v956
        %v964 = vsel %vm924, %v896, %v952
        %965 = vset.pattern.permute.xlu0 5
        %966 = vperm.xlu0 %965, %v737
        %v967 = vpop.permute.xlu0 %966
        %969 = vset.pattern.permute.xlu0 5
        %970 = vperm.xlu0 %969, %v738
        %v971 = vpop.permute.xlu0 %970
        %973 = vset.pattern.permute.xlu0 5
        %974 = vperm.xlu0 %973, %v739
        %v975 = vpop.permute.xlu0 %974
        %977 = vset.pattern.permute.xlu0 5
        %978 = vperm.xlu0 %977, %v740
        %v979 = vpop.permute.xlu0 %978
        %v981 = vmul.f32 %v729, %v967
        %v982 = vmul.f32 %v730, %v967
        %v983 = vmul.f32 %v731, %v971
        %v984 = vmul.f32 %v732, %v971
        %v985 = vmul.f32 %v733, %v975
        %v986 = vmul.f32 %v734, %v975
        %v987 = vmul.f32 %v735, %v979
        %v988 = vmul.f32 %v736, %v979
        %989 = vset.pattern.permute.xlu0 6
        %990 = vperm.xlu0 %989, %v737
        %v991 = vpop.permute.xlu0 %990
        %993 = vset.pattern.permute.xlu0 6
        %994 = vperm.xlu0 %993, %v738
        %v995 = vpop.permute.xlu0 %994
        %997 = vset.pattern.permute.xlu0 6
        %998 = vperm.xlu0 %997, %v739
        %v999 = vpop.permute.xlu0 %998
        %1001 = vset.pattern.permute.xlu0 6
        %1002 = vperm.xlu0 %1001, %v740
        %v1003 = vpop.permute.xlu0 %1002
        %v1005 = vmul.f32 %v697, %v991
        %v1006 = vmul.f32 %v698, %v991
        %v1007 = vmul.f32 %v699, %v995
        %v1008 = vmul.f32 %v700, %v995
        %v1009 = vmul.f32 %v701, %v999
        %v1010 = vmul.f32 %v702, %v999
        %v1011 = vmul.f32 %v703, %v1003
        %v1012 = vmul.f32 %v704, %v1003
        %v1013 = vadd.f32 %v981, %v1005
        %v1014 = vadd.f32 %v982, %v1006
        %v1015 = vadd.f32 %v983, %v1007
        %v1016 = vadd.f32 %v984, %v1008
        %v1017 = vadd.f32 %v985, %v1009
        %v1018 = vadd.f32 %v986, %v1010
        %v1019 = vadd.f32 %v987, %v1011
        %v1020 = vadd.f32 %v988, %v1012
        %1021 = vset.pattern.permute.xlu0 7
        %1022 = vperm.xlu0 %1021, %v737
        %v1023 = vpop.permute.xlu0 %1022
        %1025 = vset.pattern.permute.xlu0 7
        %1026 = vperm.xlu0 %1025, %v738
        %v1027 = vpop.permute.xlu0 %1026
        %1029 = vset.pattern.permute.xlu0 7
        %1030 = vperm.xlu0 %1029, %v739
        %v1031 = vpop.permute.xlu0 %1030
        %1033 = vset.pattern.permute.xlu0 7
        %1034 = vperm.xlu0 %1033, %v740
        %v1035 = vpop.permute.xlu0 %1034
        %v1037 = vmul.f32 %v578, %v1023
        %v1038 = vmul.f32 %v579, %v1023
        %v1039 = vmul.f32 %v580, %v1027
        %v1040 = vmul.f32 %v581, %v1027
        %v1041 = vmul.f32 %v582, %v1031
        %v1042 = vmul.f32 %v583, %v1031
        %v1043 = vmul.f32 %v584, %v1035
        %v1044 = vmul.f32 %v585, %v1035
        %v1045 = vadd.f32 %v1013, %v1037
        %v1046 = vadd.f32 %v1014, %v1038
        %v1047 = vadd.f32 %v1015, %v1039
        %v1048 = vadd.f32 %v1016, %v1040
        %v1049 = vadd.f32 %v1017, %v1041
        %v1050 = vadd.f32 %v1018, %v1042
        %v1051 = vadd.f32 %v1019, %v1043
        %v1052 = vadd.f32 %v1020, %v1044
        %1053 = vset.pattern.permute.xlu0 8
        %1054 = vperm.xlu0 %1053, %v737
        %v1055 = vpop.permute.xlu0 %1054
        %1057 = vset.pattern.permute.xlu0 8
        %1058 = vperm.xlu0 %1057, %v738
        %v1059 = vpop.permute.xlu0 %1058
        %1061 = vset.pattern.permute.xlu0 8
        %1062 = vperm.xlu0 %1061, %v739
        %v1063 = vpop.permute.xlu0 %1062
        %1065 = vset.pattern.permute.xlu0 8
        %1066 = vperm.xlu0 %1065, %v740
        %v1067 = vpop.permute.xlu0 %1066
        %v1069 = vmul.f32 %v628, %v1055
        %v1070 = vmul.f32 %v629, %v1055
        %v1071 = vmul.f32 %v630, %v1059
        %v1072 = vmul.f32 %v631, %v1059
        %v1073 = vmul.f32 %v632, %v1063
        %v1074 = vmul.f32 %v633, %v1063
        %v1075 = vmul.f32 %v634, %v1067
        %v1076 = vmul.f32 %v635, %v1067
        %v1077 = vadd.f32 %v1045, %v1069
        %v1078 = vadd.f32 %v1046, %v1070
        %v1079 = vadd.f32 %v1047, %v1071
        %v1080 = vadd.f32 %v1048, %v1072
        %v1081 = vadd.f32 %v1049, %v1073
        %v1082 = vadd.f32 %v1050, %v1074
        %v1083 = vadd.f32 %v1051, %v1075
        %v1084 = vadd.f32 %v1052, %v1076
        %1085 = vset.pattern.permute.xlu0 9
        %1086 = vperm.xlu0 %1085, %v737
        %v1087 = vpop.permute.xlu0 %1086
        %1089 = vset.pattern.permute.xlu0 9
        %1090 = vperm.xlu0 %1089, %v738
        %v1091 = vpop.permute.xlu0 %1090
        %1093 = vset.pattern.permute.xlu0 9
        %1094 = vperm.xlu0 %1093, %v739
        %v1095 = vpop.permute.xlu0 %1094
        %1097 = vset.pattern.permute.xlu0 9
        %1098 = vperm.xlu0 %1097, %v740
        %v1099 = vpop.permute.xlu0 %1098
        %v1101 = vmul.f32 %v660, %v1087
        %v1102 = vmul.f32 %v661, %v1087
        %v1103 = vmul.f32 %v662, %v1091
        %v1104 = vmul.f32 %v663, %v1091
        %v1105 = vmul.f32 %v664, %v1095
        %v1106 = vmul.f32 %v665, %v1095
        %v1107 = vmul.f32 %v666, %v1099
        %v1108 = vmul.f32 %v667, %v1099
        %v1109 = vadd.f32 %v1077, %v1101
        %v1110 = vadd.f32 %v1078, %v1102
        %v1111 = vadd.f32 %v1079, %v1103
        %v1112 = vadd.f32 %v1080, %v1104
        %v1113 = vadd.f32 %v1081, %v1105
        %v1114 = vadd.f32 %v1082, %v1106
        %v1115 = vadd.f32 %v1083, %v1107
        %v1116 = vadd.f32 %v1084, %v1108
        %1117 = vrot.lane.b32.xlu0 %v1109, 16
        %v1118 = vpop.permute.xlu0 %1117
        %1119 = vrot.lane.b32.xlu0 %v1111, 16
        %v1120 = vpop.permute.xlu0 %1119
        %1121 = vrot.lane.b32.xlu0 %v1113, 16
        %v1122 = vpop.permute.xlu0 %1121
        %1123 = vrot.lane.b32.xlu0 %v1115, 16
        %v1124 = vpop.permute.xlu0 %1123
        %1125 = vrot.lane.b32.xlu0 %v1110, 16
        %v1126 = vpop.permute.xlu0 %1125
        %1127 = vrot.lane.b32.xlu0 %v1112, 16
        %v1128 = vpop.permute.xlu0 %1127
        %1129 = vrot.lane.b32.xlu0 %v1114, 16
        %v1130 = vpop.permute.xlu0 %1129
        %1131 = vrot.lane.b32.xlu0 %v1116, 16
        %v1132 = vpop.permute.xlu0 %1131
        %v1133 = vsel %vm595, %v1118, %v1126
        %v1134 = vsel %vm595, %v1120, %v1128
        %v1135 = vsel %vm595, %v1122, %v1130
        %v1136 = vsel %vm595, %v1124, %v1132
        %v1137 = vsel %vm595, %v1126, %v1118
        %v1138 = vsel %vm595, %v1128, %v1120
        %v1139 = vsel %vm595, %v1130, %v1122
        %v1140 = vsel %vm595, %v1132, %v1124
        %v1141 = vsel %vm923, %v1109, %v1137
        %v1142 = vsel %vm924, %v1110, %v1133
        %v1143 = vsel %vm923, %v1111, %v1138
        %v1144 = vsel %vm924, %v1112, %v1134
        %v1145 = vsel %vm923, %v1113, %v1139
        %v1146 = vsel %vm924, %v1114, %v1135
        %v1147 = vsel %vm923, %v1115, %v1140
        %v1148 = vsel %vm924, %v1116, %v1136
        %v1149 = vadd.f32 %v957, %v1141
        %v1150 = vadd.f32 %v958, %v1142
        %v1151 = vadd.f32 %v959, %v1143
        %v1152 = vadd.f32 %v960, %v1144
        %v1153 = vadd.f32 %v961, %v1145
        %v1154 = vadd.f32 %v962, %v1146
        %v1155 = vadd.f32 %v963, %v1147
        %v1156 = vadd.f32 %v964, %v1148
        %1157 = vset.pattern.permute.xlu0 10
        %1158 = vperm.xlu0 %1157, %v737
        %v1159 = vpop.permute.xlu0 %1158
        %1161 = vset.pattern.permute.xlu0 10
        %1162 = vperm.xlu0 %1161, %v738
        %v1163 = vpop.permute.xlu0 %1162
        %1165 = vset.pattern.permute.xlu0 10
        %1166 = vperm.xlu0 %1165, %v739
        %v1167 = vpop.permute.xlu0 %1166
        %1169 = vset.pattern.permute.xlu0 10
        %1170 = vperm.xlu0 %1169, %v740
        %v1171 = vpop.permute.xlu0 %1170
        %v1173 = vmul.f32 %v729, %v1159
        %v1174 = vmul.f32 %v730, %v1159
        %v1175 = vmul.f32 %v731, %v1163
        %v1176 = vmul.f32 %v732, %v1163
        %v1177 = vmul.f32 %v733, %v1167
        %v1178 = vmul.f32 %v734, %v1167
        %v1179 = vmul.f32 %v735, %v1171
        %v1180 = vmul.f32 %v736, %v1171
        %1181 = vset.pattern.permute.xlu0 11
        %1182 = vperm.xlu0 %1181, %v737
        %v1183 = vpop.permute.xlu0 %1182
        %1185 = vset.pattern.permute.xlu0 11
        %1186 = vperm.xlu0 %1185, %v738
        %v1187 = vpop.permute.xlu0 %1186
        %1189 = vset.pattern.permute.xlu0 11
        %1190 = vperm.xlu0 %1189, %v739
        %v1191 = vpop.permute.xlu0 %1190
        %1193 = vset.pattern.permute.xlu0 11
        %1194 = vperm.xlu0 %1193, %v740
        %v1195 = vpop.permute.xlu0 %1194
        %v1197 = vmul.f32 %v697, %v1183
        %v1198 = vmul.f32 %v698, %v1183
        %v1199 = vmul.f32 %v699, %v1187
        %v1200 = vmul.f32 %v700, %v1187
        %v1201 = vmul.f32 %v701, %v1191
        %v1202 = vmul.f32 %v702, %v1191
        %v1203 = vmul.f32 %v703, %v1195
        %v1204 = vmul.f32 %v704, %v1195
        %v1205 = vadd.f32 %v1173, %v1197
        %v1206 = vadd.f32 %v1174, %v1198
        %v1207 = vadd.f32 %v1175, %v1199
        %v1208 = vadd.f32 %v1176, %v1200
        %v1209 = vadd.f32 %v1177, %v1201
        %v1210 = vadd.f32 %v1178, %v1202
        %v1211 = vadd.f32 %v1179, %v1203
        %v1212 = vadd.f32 %v1180, %v1204
        %1213 = vset.pattern.permute.xlu0 12
        %1214 = vperm.xlu0 %1213, %v737
        %v1215 = vpop.permute.xlu0 %1214
        %1217 = vset.pattern.permute.xlu0 12
        %1218 = vperm.xlu0 %1217, %v738
        %v1219 = vpop.permute.xlu0 %1218
        %1221 = vset.pattern.permute.xlu0 12
        %1222 = vperm.xlu0 %1221, %v739
        %v1223 = vpop.permute.xlu0 %1222
        %1225 = vset.pattern.permute.xlu0 12
        %1226 = vperm.xlu0 %1225, %v740
        %v1227 = vpop.permute.xlu0 %1226
        %v1229 = vmul.f32 %v578, %v1215
        %v1230 = vmul.f32 %v579, %v1215
        %v1231 = vmul.f32 %v580, %v1219
        %v1232 = vmul.f32 %v581, %v1219
        %v1233 = vmul.f32 %v582, %v1223
        %v1234 = vmul.f32 %v583, %v1223
        %v1235 = vmul.f32 %v584, %v1227
        %v1236 = vmul.f32 %v585, %v1227
        %v1237 = vadd.f32 %v1205, %v1229
        %v1238 = vadd.f32 %v1206, %v1230
        %v1239 = vadd.f32 %v1207, %v1231
        %v1240 = vadd.f32 %v1208, %v1232
        %v1241 = vadd.f32 %v1209, %v1233
        %v1242 = vadd.f32 %v1210, %v1234
        %v1243 = vadd.f32 %v1211, %v1235
        %v1244 = vadd.f32 %v1212, %v1236
        %1245 = vset.pattern.permute.xlu0 13
        %1246 = vperm.xlu0 %1245, %v737
        %v1247 = vpop.permute.xlu0 %1246
        %1249 = vset.pattern.permute.xlu0 13
        %1250 = vperm.xlu0 %1249, %v738
        %v1251 = vpop.permute.xlu0 %1250
        %1253 = vset.pattern.permute.xlu0 13
        %1254 = vperm.xlu0 %1253, %v739
        %v1255 = vpop.permute.xlu0 %1254
        %1257 = vset.pattern.permute.xlu0 13
        %1258 = vperm.xlu0 %1257, %v740
        %v1259 = vpop.permute.xlu0 %1258
        %v1261 = vmul.f32 %v628, %v1247
        %v1262 = vmul.f32 %v629, %v1247
        %v1263 = vmul.f32 %v630, %v1251
        %v1264 = vmul.f32 %v631, %v1251
        %v1265 = vmul.f32 %v632, %v1255
        %v1266 = vmul.f32 %v633, %v1255
        %v1267 = vmul.f32 %v634, %v1259
        %v1268 = vmul.f32 %v635, %v1259
        %v1269 = vadd.f32 %v1237, %v1261
        %v1270 = vadd.f32 %v1238, %v1262
        %v1271 = vadd.f32 %v1239, %v1263
        %v1272 = vadd.f32 %v1240, %v1264
        %v1273 = vadd.f32 %v1241, %v1265
        %v1274 = vadd.f32 %v1242, %v1266
        %v1275 = vadd.f32 %v1243, %v1267
        %v1276 = vadd.f32 %v1244, %v1268
        %1277 = vset.pattern.permute.xlu0 14
        %1278 = vperm.xlu0 %1277, %v737
        %v1279 = vpop.permute.xlu0 %1278
        %1281 = vset.pattern.permute.xlu0 14
        %1282 = vperm.xlu0 %1281, %v738
        %v1283 = vpop.permute.xlu0 %1282
        %1285 = vset.pattern.permute.xlu0 14
        %1286 = vperm.xlu0 %1285, %v739
        %v1287 = vpop.permute.xlu0 %1286
        %1289 = vset.pattern.permute.xlu0 14
        %1290 = vperm.xlu0 %1289, %v740
        %v1291 = vpop.permute.xlu0 %1290
        %v1293 = vmul.f32 %v660, %v1279
        %v1294 = vmul.f32 %v661, %v1279
        %v1295 = vmul.f32 %v662, %v1283
        %v1296 = vmul.f32 %v663, %v1283
        %v1297 = vmul.f32 %v664, %v1287
        %v1298 = vmul.f32 %v665, %v1287
        %v1299 = vmul.f32 %v666, %v1291
        %v1300 = vmul.f32 %v667, %v1291
        %v1301 = vadd.f32 %v1269, %v1293
        %v1302 = vadd.f32 %v1270, %v1294
        %v1303 = vadd.f32 %v1271, %v1295
        %v1304 = vadd.f32 %v1272, %v1296
        %v1305 = vadd.f32 %v1273, %v1297
        %v1306 = vadd.f32 %v1274, %v1298
        %v1307 = vadd.f32 %v1275, %v1299
        %v1308 = vadd.f32 %v1276, %v1300
        %v1309 = vadd.f32 %v1149, %v1301
        %v1310 = vadd.f32 %v1150, %v1302
        %v1311 = vadd.f32 %v1151, %v1303
        %v1312 = vadd.f32 %v1152, %v1304
        %v1313 = vadd.f32 %v1153, %v1305
        %v1314 = vadd.f32 %v1154, %v1306
        %v1315 = vadd.f32 %v1155, %v1307
        %v1316 = vadd.f32 %v1156, %v1308
        %1317 = vset.pattern.permute.xlu0 15
        %1318 = vperm.xlu0 %1317, %v737
        %v1319 = vpop.permute.xlu0 %1318
        %1321 = vset.pattern.permute.xlu0 15
        %1322 = vperm.xlu0 %1321, %v738
        %v1323 = vpop.permute.xlu0 %1322
        %1325 = vset.pattern.permute.xlu0 15
        %1326 = vperm.xlu0 %1325, %v739
        %v1327 = vpop.permute.xlu0 %1326
        %1329 = vset.pattern.permute.xlu0 15
        %1330 = vperm.xlu0 %1329, %v740
        %v1331 = vpop.permute.xlu0 %1330
        %v1333 = vmul.f32 %v729, %v1319
        %v1334 = vmul.f32 %v730, %v1319
        %v1335 = vmul.f32 %v731, %v1323
        %v1336 = vmul.f32 %v732, %v1323
        %v1337 = vmul.f32 %v733, %v1327
        %v1338 = vmul.f32 %v734, %v1327
        %v1339 = vmul.f32 %v735, %v1331
        %v1340 = vmul.f32 %v736, %v1331
        %1341 = vset.pattern.permute.xlu0 16
        %1342 = vperm.xlu0 %1341, %v737
        %v1343 = vpop.permute.xlu0 %1342
        %1345 = vset.pattern.permute.xlu0 16
        %1346 = vperm.xlu0 %1345, %v738
        %v1347 = vpop.permute.xlu0 %1346
        %1349 = vset.pattern.permute.xlu0 16
        %1350 = vperm.xlu0 %1349, %v739
        %v1351 = vpop.permute.xlu0 %1350
        %1353 = vset.pattern.permute.xlu0 16
        %1354 = vperm.xlu0 %1353, %v740
        %v1355 = vpop.permute.xlu0 %1354
        %v1357 = vmul.f32 %v697, %v1343
        %v1358 = vmul.f32 %v698, %v1343
        %v1359 = vmul.f32 %v699, %v1347
        %v1360 = vmul.f32 %v700, %v1347
        %v1361 = vmul.f32 %v701, %v1351
        %v1362 = vmul.f32 %v702, %v1351
        %v1363 = vmul.f32 %v703, %v1355
        %v1364 = vmul.f32 %v704, %v1355
        %v1365 = vadd.f32 %v1333, %v1357
        %v1366 = vadd.f32 %v1334, %v1358
        %v1367 = vadd.f32 %v1335, %v1359
        %v1368 = vadd.f32 %v1336, %v1360
        %v1369 = vadd.f32 %v1337, %v1361
        %v1370 = vadd.f32 %v1338, %v1362
        %v1371 = vadd.f32 %v1339, %v1363
        %v1372 = vadd.f32 %v1340, %v1364
        %1373 = vset.pattern.permute.xlu0 17
        %1374 = vperm.xlu0 %1373, %v737
        %v1375 = vpop.permute.xlu0 %1374
        %1377 = vset.pattern.permute.xlu0 17
        %1378 = vperm.xlu0 %1377, %v738
        %v1379 = vpop.permute.xlu0 %1378
        %1381 = vset.pattern.permute.xlu0 17
        %1382 = vperm.xlu0 %1381, %v739
        %v1383 = vpop.permute.xlu0 %1382
        %1385 = vset.pattern.permute.xlu0 17
        %1386 = vperm.xlu0 %1385, %v740
        %v1387 = vpop.permute.xlu0 %1386
        %v1389 = vmul.f32 %v578, %v1375
        %v1390 = vmul.f32 %v579, %v1375
        %v1391 = vmul.f32 %v580, %v1379
        %v1392 = vmul.f32 %v581, %v1379
        %v1393 = vmul.f32 %v582, %v1383
        %v1394 = vmul.f32 %v583, %v1383
        %v1395 = vmul.f32 %v584, %v1387
        %v1396 = vmul.f32 %v585, %v1387
        %v1397 = vadd.f32 %v1365, %v1389
        %v1398 = vadd.f32 %v1366, %v1390
        %v1399 = vadd.f32 %v1367, %v1391
        %v1400 = vadd.f32 %v1368, %v1392
        %v1401 = vadd.f32 %v1369, %v1393
        %v1402 = vadd.f32 %v1370, %v1394
        %v1403 = vadd.f32 %v1371, %v1395
        %v1404 = vadd.f32 %v1372, %v1396
        %1405 = vset.pattern.permute.xlu0 18
        %1406 = vperm.xlu0 %1405, %v737
        %v1407 = vpop.permute.xlu0 %1406
        %1409 = vset.pattern.permute.xlu0 18
        %1410 = vperm.xlu0 %1409, %v738
        %v1411 = vpop.permute.xlu0 %1410
        %1413 = vset.pattern.permute.xlu0 18
        %1414 = vperm.xlu0 %1413, %v739
        %v1415 = vpop.permute.xlu0 %1414
        %1417 = vset.pattern.permute.xlu0 18
        %1418 = vperm.xlu0 %1417, %v740
        %v1419 = vpop.permute.xlu0 %1418
        %v1421 = vmul.f32 %v628, %v1407
        %v1422 = vmul.f32 %v629, %v1407
        %v1423 = vmul.f32 %v630, %v1411
        %v1424 = vmul.f32 %v631, %v1411
        %v1425 = vmul.f32 %v632, %v1415
        %v1426 = vmul.f32 %v633, %v1415
        %v1427 = vmul.f32 %v634, %v1419
        %v1428 = vmul.f32 %v635, %v1419
        %v1429 = vadd.f32 %v1397, %v1421
        %v1430 = vadd.f32 %v1398, %v1422
        %v1431 = vadd.f32 %v1399, %v1423
        %v1432 = vadd.f32 %v1400, %v1424
        %v1433 = vadd.f32 %v1401, %v1425
        %v1434 = vadd.f32 %v1402, %v1426
        %v1435 = vadd.f32 %v1403, %v1427
        %v1436 = vadd.f32 %v1404, %v1428
        %1437 = vset.pattern.permute.xlu0 19
        %1438 = vperm.xlu0 %1437, %v737
        %v1439 = vpop.permute.xlu0 %1438
        %1441 = vset.pattern.permute.xlu0 19
        %1442 = vperm.xlu0 %1441, %v738
        %v1443 = vpop.permute.xlu0 %1442
        %1445 = vset.pattern.permute.xlu0 19
        %1446 = vperm.xlu0 %1445, %v739
        %v1447 = vpop.permute.xlu0 %1446
        %1449 = vset.pattern.permute.xlu0 19
        %1450 = vperm.xlu0 %1449, %v740
        %v1451 = vpop.permute.xlu0 %1450
        %v1453 = vmul.f32 %v660, %v1439
        %v1454 = vmul.f32 %v661, %v1439
        %v1455 = vmul.f32 %v662, %v1443
        %v1456 = vmul.f32 %v663, %v1443
        %v1457 = vmul.f32 %v664, %v1447
        %v1458 = vmul.f32 %v665, %v1447
        %v1459 = vmul.f32 %v666, %v1451
        %v1460 = vmul.f32 %v667, %v1451
        %v1461 = vadd.f32 %v1429, %v1453
        %v1462 = vadd.f32 %v1430, %v1454
        %v1463 = vadd.f32 %v1431, %v1455
        %v1464 = vadd.f32 %v1432, %v1456
        %v1465 = vadd.f32 %v1433, %v1457
        %v1466 = vadd.f32 %v1434, %v1458
        %v1467 = vadd.f32 %v1435, %v1459
        %v1468 = vadd.f32 %v1436, %v1460
        %1469 = vrot.lane.b32.xlu0 %v1461, 112
        %v1470 = vpop.permute.xlu0 %1469
        %1471 = vrot.lane.b32.xlu0 %v1463, 112
        %v1472 = vpop.permute.xlu0 %1471
        %1473 = vrot.lane.b32.xlu0 %v1465, 112
        %v1474 = vpop.permute.xlu0 %1473
        %1475 = vrot.lane.b32.xlu0 %v1467, 112
        %v1476 = vpop.permute.xlu0 %1475
        %1477 = vrot.lane.b32.xlu0 %v1462, 112
        %v1478 = vpop.permute.xlu0 %1477
        %1479 = vrot.lane.b32.xlu0 %v1464, 112
        %v1480 = vpop.permute.xlu0 %1479
        %1481 = vrot.lane.b32.xlu0 %v1466, 112
        %v1482 = vpop.permute.xlu0 %1481
        %1483 = vrot.lane.b32.xlu0 %v1468, 112
        %v1484 = vpop.permute.xlu0 %1483
        %vm1485 = vcmp.lt.s32.totalorder %v587, 112
        %v1486 = vsel %vm1485, %v1470, %v1478
        %v1487 = vsel %vm1485, %v1472, %v1480
        %v1488 = vsel %vm1485, %v1474, %v1482
        %v1489 = vsel %vm1485, %v1476, %v1484
        %v1490 = vsel %vm1485, %v1478, %v1470
        %v1491 = vsel %vm1485, %v1480, %v1472
        %v1492 = vsel %vm1485, %v1482, %v1474
        %v1493 = vsel %vm1485, %v1484, %v1476
        %v1494 = vsel %vm597, 1, 0
        %v1495 = vsel %vm598, 1, 0
        %vm1496 = vcmp.eq.s32.totalorder %v1494, 1
        %vm1497 = vcmp.eq.s32.totalorder %v1495, 1
        %v1498 = vsel %vm1496, %v1461, %v1486
        %v1499 = vsel %vm1497, %v1462, %v1490
        %v1500 = vsel %vm1496, %v1463, %v1487
        %v1501 = vsel %vm1497, %v1464, %v1491
        %v1502 = vsel %vm1496, %v1465, %v1488
        %v1503 = vsel %vm1497, %v1466, %v1492
        %v1504 = vsel %vm1496, %v1467, %v1489
        %v1505 = vsel %vm1497, %v1468, %v1493
        %v1506 = vadd.f32 %v1309, %v1498
        %v1507 = vadd.f32 %v1310, %v1499
        %v1508 = vadd.f32 %v1311, %v1500
        %v1509 = vadd.f32 %v1312, %v1501
        %v1510 = vadd.f32 %v1313, %v1502
        %v1511 = vadd.f32 %v1314, %v1503
        %v1512 = vadd.f32 %v1315, %v1504
        %v1513 = vadd.f32 %v1316, %v1505
        %1514 = vset.pattern.permute.xlu0 20
        %1515 = vperm.xlu0 %1514, %v737
        %v1516 = vpop.permute.xlu0 %1515
        %1518 = vset.pattern.permute.xlu0 20
        %1519 = vperm.xlu0 %1518, %v738
        %v1520 = vpop.permute.xlu0 %1519
        %1522 = vset.pattern.permute.xlu0 20
        %1523 = vperm.xlu0 %1522, %v739
        %v1524 = vpop.permute.xlu0 %1523
        %1526 = vset.pattern.permute.xlu0 20
        %1527 = vperm.xlu0 %1526, %v740
        %v1528 = vpop.permute.xlu0 %1527
        %v1530 = vmul.f32 %v729, %v1516
        %v1531 = vmul.f32 %v730, %v1516
        %v1532 = vmul.f32 %v731, %v1520
        %v1533 = vmul.f32 %v732, %v1520
        %v1534 = vmul.f32 %v733, %v1524
        %v1535 = vmul.f32 %v734, %v1524
        %v1536 = vmul.f32 %v735, %v1528
        %v1537 = vmul.f32 %v736, %v1528
        %1538 = vset.pattern.permute.xlu0 21
        %1539 = vperm.xlu0 %1538, %v737
        %v1540 = vpop.permute.xlu0 %1539
        %1542 = vset.pattern.permute.xlu0 21
        %1543 = vperm.xlu0 %1542, %v738
        %v1544 = vpop.permute.xlu0 %1543
        %1546 = vset.pattern.permute.xlu0 21
        %1547 = vperm.xlu0 %1546, %v739
        %v1548 = vpop.permute.xlu0 %1547
        %1550 = vset.pattern.permute.xlu0 21
        %1551 = vperm.xlu0 %1550, %v740
        %v1552 = vpop.permute.xlu0 %1551
        %v1554 = vmul.f32 %v697, %v1540
        %v1555 = vmul.f32 %v698, %v1540
        %v1556 = vmul.f32 %v699, %v1544
        %v1557 = vmul.f32 %v700, %v1544
        %v1558 = vmul.f32 %v701, %v1548
        %v1559 = vmul.f32 %v702, %v1548
        %v1560 = vmul.f32 %v703, %v1552
        %v1561 = vmul.f32 %v704, %v1552
        %v1562 = vadd.f32 %v1530, %v1554
        %v1563 = vadd.f32 %v1531, %v1555
        %v1564 = vadd.f32 %v1532, %v1556
        %v1565 = vadd.f32 %v1533, %v1557
        %v1566 = vadd.f32 %v1534, %v1558
        %v1567 = vadd.f32 %v1535, %v1559
        %v1568 = vadd.f32 %v1536, %v1560
        %v1569 = vadd.f32 %v1537, %v1561
        %1570 = vset.pattern.permute.xlu0 22
        %1571 = vperm.xlu0 %1570, %v737
        %v1572 = vpop.permute.xlu0 %1571
        %1574 = vset.pattern.permute.xlu0 22
        %1575 = vperm.xlu0 %1574, %v738
        %v1576 = vpop.permute.xlu0 %1575
        %1578 = vset.pattern.permute.xlu0 22
        %1579 = vperm.xlu0 %1578, %v739
        %v1580 = vpop.permute.xlu0 %1579
        %1582 = vset.pattern.permute.xlu0 22
        %1583 = vperm.xlu0 %1582, %v740
        %v1584 = vpop.permute.xlu0 %1583
        %v1586 = vmul.f32 %v578, %v1572
        %v1587 = vmul.f32 %v579, %v1572
        %v1588 = vmul.f32 %v580, %v1576
        %v1589 = vmul.f32 %v581, %v1576
        %v1590 = vmul.f32 %v582, %v1580
        %v1591 = vmul.f32 %v583, %v1580
        %v1592 = vmul.f32 %v584, %v1584
        %v1593 = vmul.f32 %v585, %v1584
        %v1594 = vadd.f32 %v1562, %v1586
        %v1595 = vadd.f32 %v1563, %v1587
        %v1596 = vadd.f32 %v1564, %v1588
        %v1597 = vadd.f32 %v1565, %v1589
        %v1598 = vadd.f32 %v1566, %v1590
        %v1599 = vadd.f32 %v1567, %v1591
        %v1600 = vadd.f32 %v1568, %v1592
        %v1601 = vadd.f32 %v1569, %v1593
        %1602 = vset.pattern.permute.xlu0 23
        %1603 = vperm.xlu0 %1602, %v737
        %v1604 = vpop.permute.xlu0 %1603
        %1606 = vset.pattern.permute.xlu0 23
        %1607 = vperm.xlu0 %1606, %v738
        %v1608 = vpop.permute.xlu0 %1607
        %1610 = vset.pattern.permute.xlu0 23
        %1611 = vperm.xlu0 %1610, %v739
        %v1612 = vpop.permute.xlu0 %1611
        %1614 = vset.pattern.permute.xlu0 23
        %1615 = vperm.xlu0 %1614, %v740
        %v1616 = vpop.permute.xlu0 %1615
        %v1618 = vmul.f32 %v628, %v1604
        %v1619 = vmul.f32 %v629, %v1604
        %v1620 = vmul.f32 %v630, %v1608
        %v1621 = vmul.f32 %v631, %v1608
        %v1622 = vmul.f32 %v632, %v1612
        %v1623 = vmul.f32 %v633, %v1612
        %v1624 = vmul.f32 %v634, %v1616
        %v1625 = vmul.f32 %v635, %v1616
        %v1626 = vadd.f32 %v1594, %v1618
        %v1627 = vadd.f32 %v1595, %v1619
        %v1628 = vadd.f32 %v1596, %v1620
        %v1629 = vadd.f32 %v1597, %v1621
        %v1630 = vadd.f32 %v1598, %v1622
        %v1631 = vadd.f32 %v1599, %v1623
        %v1632 = vadd.f32 %v1600, %v1624
        %v1633 = vadd.f32 %v1601, %v1625
        %1634 = vset.pattern.permute.xlu0 24
        %1635 = vperm.xlu0 %1634, %v737
        %v1636 = vpop.permute.xlu0 %1635
        %1638 = vset.pattern.permute.xlu0 24
        %1639 = vperm.xlu0 %1638, %v738
        %v1640 = vpop.permute.xlu0 %1639
        %1642 = vset.pattern.permute.xlu0 24
        %1643 = vperm.xlu0 %1642, %v739
        %v1644 = vpop.permute.xlu0 %1643
        %1646 = vset.pattern.permute.xlu0 24
        %1647 = vperm.xlu0 %1646, %v740
        %v1648 = vpop.permute.xlu0 %1647
        %v1650 = vmul.f32 %v660, %v1636
        %v1651 = vmul.f32 %v661, %v1636
        %v1652 = vmul.f32 %v662, %v1640
        %v1653 = vmul.f32 %v663, %v1640
        %v1654 = vmul.f32 %v664, %v1644
        %v1655 = vmul.f32 %v665, %v1644
        %v1656 = vmul.f32 %v666, %v1648
        %v1657 = vmul.f32 %v667, %v1648
        %v1658 = vadd.f32 %v1626, %v1650
        %v1659 = vadd.f32 %v1627, %v1651
        %v1660 = vadd.f32 %v1628, %v1652
        %v1661 = vadd.f32 %v1629, %v1653
        %v1662 = vadd.f32 %v1630, %v1654
        %v1663 = vadd.f32 %v1631, %v1655
        %v1664 = vadd.f32 %v1632, %v1656
        %v1665 = vadd.f32 %v1633, %v1657
        %1666 = vrot.lane.b32.xlu0 %v1658, 112
        %v1667 = vpop.permute.xlu0 %1666
        %1668 = vrot.lane.b32.xlu0 %v1660, 112
        %v1669 = vpop.permute.xlu0 %1668
        %1670 = vrot.lane.b32.xlu0 %v1662, 112
        %v1671 = vpop.permute.xlu0 %1670
        %1672 = vrot.lane.b32.xlu0 %v1664, 112
        %v1673 = vpop.permute.xlu0 %1672
        %1674 = vrot.lane.b32.xlu0 %v1659, 112
        %v1675 = vpop.permute.xlu0 %1674
        %1676 = vrot.lane.b32.xlu0 %v1661, 112
        %v1677 = vpop.permute.xlu0 %1676
        %1678 = vrot.lane.b32.xlu0 %v1663, 112
        %v1679 = vpop.permute.xlu0 %1678
        %1680 = vrot.lane.b32.xlu0 %v1665, 112
        %v1681 = vpop.permute.xlu0 %1680
        %v1682 = vsel %vm1485, %v1667, %v1675
        %v1683 = vsel %vm1485, %v1669, %v1677
        %v1684 = vsel %vm1485, %v1671, %v1679
        %v1685 = vsel %vm1485, %v1673, %v1681
        %v1686 = vsel %vm1485, %v1675, %v1667
        %v1687 = vsel %vm1485, %v1677, %v1669
        %v1688 = vsel %vm1485, %v1679, %v1671
        %v1689 = vsel %vm1485, %v1681, %v1673
        %v1690 = vsel %vm1496, %v1658, %v1682
        %v1691 = vsel %vm1497, %v1659, %v1686
        %v1692 = vsel %vm1496, %v1660, %v1683
        %v1693 = vsel %vm1497, %v1661, %v1687
        %v1694 = vsel %vm1496, %v1662, %v1684
        %v1695 = vsel %vm1497, %v1663, %v1688
        %v1696 = vsel %vm1496, %v1664, %v1685
        %v1697 = vsel %vm1497, %v1665, %v1689
        %1698 = vrot.lane.b32.xlu0 %v1690, 112
        %v1699 = vpop.permute.xlu0 %1698
        %1700 = vrot.lane.b32.xlu0 %v1692, 112
        %v1701 = vpop.permute.xlu0 %1700
        %1702 = vrot.lane.b32.xlu0 %v1694, 112
        %v1703 = vpop.permute.xlu0 %1702
        %1704 = vrot.lane.b32.xlu0 %v1696, 112
        %v1705 = vpop.permute.xlu0 %1704
        %1706 = vrot.lane.b32.xlu0 %v1691, 112
        %v1707 = vpop.permute.xlu0 %1706
        %1708 = vrot.lane.b32.xlu0 %v1693, 112
        %v1709 = vpop.permute.xlu0 %1708
        %1710 = vrot.lane.b32.xlu0 %v1695, 112
        %v1711 = vpop.permute.xlu0 %1710
        %1712 = vrot.lane.b32.xlu0 %v1697, 112
        %v1713 = vpop.permute.xlu0 %1712
        %v1714 = vsel %vm1485, %v1699, %v1707
        %v1715 = vsel %vm1485, %v1701, %v1709
        %v1716 = vsel %vm1485, %v1703, %v1711
        %v1717 = vsel %vm1485, %v1705, %v1713
        %v1718 = vsel %vm1485, %v1707, %v1699
        %v1719 = vsel %vm1485, %v1709, %v1701
        %v1720 = vsel %vm1485, %v1711, %v1703
        %v1721 = vsel %vm1485, %v1713, %v1705
        %v1722 = vsel %vm1496, %v1658, %v1714
        %v1723 = vsel %vm1497, %v1659, %v1718
        %v1724 = vsel %vm1496, %v1660, %v1715
        %v1725 = vsel %vm1497, %v1661, %v1719
        %v1726 = vsel %vm1496, %v1662, %v1716
        %v1727 = vsel %vm1497, %v1663, %v1720
        %v1728 = vsel %vm1496, %v1664, %v1717
        %v1729 = vsel %vm1497, %v1665, %v1721
        %v1730 = vadd.f32 %v1506, %v1722
        %v1731 = vadd.f32 %v1507, %v1723
        %v1732 = vadd.f32 %v1508, %v1724
        %v1733 = vadd.f32 %v1509, %v1725
        %v1734 = vadd.f32 %v1510, %v1726
        %v1735 = vadd.f32 %v1511, %v1727
        %v1736 = vadd.f32 %v1512, %v1728
        %v1737 = vadd.f32 %v1513, %v1729
        %v1738 = vld [vmem:[%s4] sm:$0xff]
        %v1739 = vld [vmem:[%s4 + $0x8] sm:$0xff]
        %v1740 = vld [vmem:[%s4 + $0x10] sm:$0xff]
        %v1741 = vld [vmem:[%s4 + $0x18] sm:$0xff]
        %1743 = vset.pattern.permute.xlu0 0
        %1744 = vperm.xlu0 %1743, %v1738
        %v1745 = vpop.permute.xlu0 %1744
        %1748 = vset.pattern.permute.xlu0 0
        %1749 = vperm.xlu0 %1748, %v1739
        %v1750 = vpop.permute.xlu0 %1749
        %1753 = vset.pattern.permute.xlu0 0
        %1754 = vperm.xlu0 %1753, %v1740
        %v1755 = vpop.permute.xlu0 %1754
        %1758 = vset.pattern.permute.xlu0 0
        %1759 = vperm.xlu0 %1758, %v1741
        %v1760 = vpop.permute.xlu0 %1759
        %v1762 = vadd.f32 %v1730, %v1745
        %v1763 = vadd.f32 %v1731, %v1745
        %v1764 = vadd.f32 %v1732, %v1750
        %v1765 = vadd.f32 %v1733, %v1750
        %v1766 = vadd.f32 %v1734, %v1755
        %v1767 = vadd.f32 %v1735, %v1755
        %v1768 = vadd.f32 %v1736, %v1760
        %v1769 = vadd.f32 %v1737, %v1760
        %v1770 = vxor.u32 %v1762, 2147483648
        %v1771 = vxor.u32 %v1763, 2147483648
        %v1772 = vxor.u32 %v1764, 2147483648
        %v1773 = vxor.u32 %v1765, 2147483648
        %v1774 = vxor.u32 %v1766, 2147483648
        %v1775 = vxor.u32 %v1767, 2147483648
        %v1776 = vxor.u32 %v1768, 2147483648
        %v1777 = vxor.u32 %v1769, 2147483648
        %v1778 = vmul.f32 %v1770, 1.442695
        %v1779 = vpow.pop %v1778
        %v1780 = vmul.f32 %v1771, 1.442695
        %v1781 = vpow.pop %v1780
        %v1782 = vmul.f32 %v1772, 1.442695
        %v1783 = vpow.pop %v1782
        %v1784 = vmul.f32 %v1773, 1.442695
        %v1785 = vpow.pop %v1784
        %v1786 = vmul.f32 %v1774, 1.442695
        %v1787 = vpow.pop %v1786
        %v1788 = vmul.f32 %v1775, 1.442695
        %v1789 = vpow.pop %v1788
        %v1790 = vmul.f32 %v1776, 1.442695
        %v1791 = vpow.pop %v1790
        %v1792 = vmul.f32 %v1777, 1.442695
        %v1793 = vpow.pop %v1792
        %v1794 = vadd.f32 %v1779, 1.0
        %v1795 = vadd.f32 %v1781, 1.0
        %v1796 = vadd.f32 %v1783, 1.0
        %v1797 = vadd.f32 %v1785, 1.0
        %v1798 = vadd.f32 %v1787, 1.0
        %v1799 = vadd.f32 %v1789, 1.0
        %v1800 = vadd.f32 %v1791, 1.0
        %v1801 = vadd.f32 %v1793, 1.0
        %v1802 = vrcp.pop %v1794
        %v1803 = vmul.f32 %v1794, %v1802
        %v1804 = vsub.f32 1.0, %v1803
        %v1805 = vmul.f32 %v1802, %v1804
        %v1806 = vadd.f32 %v1802, %v1805
        %vm1807 = vweird.f32 %v1794
        %vm1808 = vweird.f32 %v1802
        %vm1809 = vmor %vm1807, %vm1808
        %v1810 = vsel %vm1809, %v1802, %v1806
        %v1811 = vand.u32 2147483647, %v1794
        %vm1812 = vcmp.eq.f32.partialorder %v1811, 8.507059e+37
        %v1813 = vand.u32 %v1794, 2147483648
        %v1814 = vor.u32 1.1754944e-38, %v1813
        %v1815 = vsel %vm1812, %v1814, %v1810
        %v1816 = vmul.f32 1.0, %v1815
        %v1817 = vrcp.pop %v1795
        %v1818 = vmul.f32 %v1795, %v1817
        %v1819 = vsub.f32 1.0, %v1818
        %v1820 = vmul.f32 %v1817, %v1819
        %v1821 = vadd.f32 %v1817, %v1820
        %vm1822 = vweird.f32 %v1795
        %vm1823 = vweird.f32 %v1817
        %vm1824 = vmor %vm1822, %vm1823
        %v1825 = vsel %vm1824, %v1817, %v1821
        %v1826 = vand.u32 2147483647, %v1795
        %vm1827 = vcmp.eq.f32.partialorder %v1826, 8.507059e+37
        %v1828 = vand.u32 %v1795, 2147483648
        %v1829 = vor.u32 1.1754944e-38, %v1828
        %v1830 = vsel %vm1827, %v1829, %v1825
        %v1831 = vmul.f32 1.0, %v1830
        %v1832 = vrcp.pop %v1796
        %v1833 = vmul.f32 %v1796, %v1832
        %v1834 = vsub.f32 1.0, %v1833
        %v1835 = vmul.f32 %v1832, %v1834
        %v1836 = vadd.f32 %v1832, %v1835
        %vm1837 = vweird.f32 %v1796
        %vm1838 = vweird.f32 %v1832
        %vm1839 = vmor %vm1837, %vm1838
        %v1840 = vsel %vm1839, %v1832, %v1836
        %v1841 = vand.u32 2147483647, %v1796
        %vm1842 = vcmp.eq.f32.partialorder %v1841, 8.507059e+37
        %v1843 = vand.u32 %v1796, 2147483648
        %v1844 = vor.u32 1.1754944e-38, %v1843
        %v1845 = vsel %vm1842, %v1844, %v1840
        %v1846 = vmul.f32 1.0, %v1845
        %v1847 = vrcp.pop %v1797
        %v1848 = vmul.f32 %v1797, %v1847
        %v1849 = vsub.f32 1.0, %v1848
        %v1850 = vmul.f32 %v1847, %v1849
        %v1851 = vadd.f32 %v1847, %v1850
        %vm1852 = vweird.f32 %v1797
        %vm1853 = vweird.f32 %v1847
        %vm1854 = vmor %vm1852, %vm1853
        %v1855 = vsel %vm1854, %v1847, %v1851
        %v1856 = vand.u32 2147483647, %v1797
        %vm1857 = vcmp.eq.f32.partialorder %v1856, 8.507059e+37
        %v1858 = vand.u32 %v1797, 2147483648
        %v1859 = vor.u32 1.1754944e-38, %v1858
        %v1860 = vsel %vm1857, %v1859, %v1855
        %v1861 = vmul.f32 1.0, %v1860
        %v1862 = vrcp.pop %v1798
        %v1863 = vmul.f32 %v1798, %v1862
        %v1864 = vsub.f32 1.0, %v1863
        %v1865 = vmul.f32 %v1862, %v1864
        %v1866 = vadd.f32 %v1862, %v1865
        %vm1867 = vweird.f32 %v1798
        %vm1868 = vweird.f32 %v1862
        %vm1869 = vmor %vm1867, %vm1868
        %v1870 = vsel %vm1869, %v1862, %v1866
        %v1871 = vand.u32 2147483647, %v1798
        %vm1872 = vcmp.eq.f32.partialorder %v1871, 8.507059e+37
        %v1873 = vand.u32 %v1798, 2147483648
        %v1874 = vor.u32 1.1754944e-38, %v1873
        %v1875 = vsel %vm1872, %v1874, %v1870
        %v1876 = vmul.f32 1.0, %v1875
        %v1877 = vrcp.pop %v1799
        %v1878 = vmul.f32 %v1799, %v1877
        %v1879 = vsub.f32 1.0, %v1878
        %v1880 = vmul.f32 %v1877, %v1879
        %v1881 = vadd.f32 %v1877, %v1880
        %vm1882 = vweird.f32 %v1799
        %vm1883 = vweird.f32 %v1877
        %vm1884 = vmor %vm1882, %vm1883
        %v1885 = vsel %vm1884, %v1877, %v1881
        %v1886 = vand.u32 2147483647, %v1799
        %vm1887 = vcmp.eq.f32.partialorder %v1886, 8.507059e+37
        %v1888 = vand.u32 %v1799, 2147483648
        %v1889 = vor.u32 1.1754944e-38, %v1888
        %v1890 = vsel %vm1887, %v1889, %v1885
        %v1891 = vmul.f32 1.0, %v1890
        %v1892 = vrcp.pop %v1800
        %v1893 = vmul.f32 %v1800, %v1892
        %v1894 = vsub.f32 1.0, %v1893
        %v1895 = vmul.f32 %v1892, %v1894
        %v1896 = vadd.f32 %v1892, %v1895
        %vm1897 = vweird.f32 %v1800
        %vm1898 = vweird.f32 %v1892
        %vm1899 = vmor %vm1897, %vm1898
        %v1900 = vsel %vm1899, %v1892, %v1896
        %v1901 = vand.u32 2147483647, %v1800
        %vm1902 = vcmp.eq.f32.partialorder %v1901, 8.507059e+37
        %v1903 = vand.u32 %v1800, 2147483648
        %v1904 = vor.u32 1.1754944e-38, %v1903
        %v1905 = vsel %vm1902, %v1904, %v1900
        %v1906 = vmul.f32 1.0, %v1905
        %v1907 = vrcp.pop %v1801
        %v1908 = vmul.f32 %v1801, %v1907
        %v1909 = vsub.f32 1.0, %v1908
        %v1910 = vmul.f32 %v1907, %v1909
        %v1911 = vadd.f32 %v1907, %v1910
        %vm1912 = vweird.f32 %v1801
        %vm1913 = vweird.f32 %v1907
        %vm1914 = vmor %vm1912, %vm1913
        %v1915 = vsel %vm1914, %v1907, %v1911
        %v1916 = vand.u32 2147483647, %v1801
        %vm1917 = vcmp.eq.f32.partialorder %v1916, 8.507059e+37
        %v1918 = vand.u32 %v1801, 2147483648
        %v1919 = vor.u32 1.1754944e-38, %v1918
        %v1920 = vsel %vm1917, %v1919, %v1915
        %v1921 = vmul.f32 1.0, %v1920
        %v1922 = vmul.f32 %v1762, %v1816
        %v1923 = vmul.f32 %v1763, %v1831
        %v1924 = vmul.f32 %v1764, %v1846
        %v1925 = vmul.f32 %v1765, %v1861
        %v1926 = vmul.f32 %v1766, %v1876
        %v1927 = vmul.f32 %v1767, %v1891
        %v1928 = vmul.f32 %v1768, %v1906
        %v1929 = vmul.f32 %v1769, %v1921
        %v1930 = vld [vmem:[%s5] sm:$0xf]
        %v1931 = vpack.c.bf16 %v1924, %v1922
        %v1932 = vpack.c.bf16 %v1925, %v1923
        %v1933 = vpack.c.bf16 %v1928, %v1926
        %v1934 = vpack.c.bf16 %v1929, %v1927
        %v1935 = vld [vmem:[%s6] sm:$0xff]
        %1937 = vset.pattern.permute.xlu0 0
        %1938 = vperm.xlu0 %1937, %v1935
        %v1939 = vpop.permute.xlu0 %1938
        %vm1941 = vcmask 261120
        %v1943 = vsel %vm1941, %v1930, 0
        %1945 = vmatpush.bf16.msra.mxu0 0
        %1946 = vmatpush.bf16.msra.mxu0 0
        %1947 = vmatpush.bf16.msra.mxu0 0
        %1948 = vmatpush.bf16.msra.mxu0 0
        %1949 = vmatpush.bf16.msra.mxu0 0
        %1950 = vmatpush.bf16.msra.mxu0 0
        %1951 = vmatpush.bf16.msra.mxu0 %v1933
        %1952 = vmatpush.bf16.msra.mxu0 %v1931
        %1953 = vmatmul.bf16.gmra.mxu0 %v1943
        %v1954 = vpop.f32.mrf.mxu0
        %v1955 = vadd.f32 %v1939, %v1954
        %v1956 = vpop.f32.mrf.mxu0
        %1957 = vdwg.mxu0
        %1958 = vmatpush.bf16.msra.mxu0 0
        %1959 = vmatpush.bf16.msra.mxu0 0
        %1960 = vmatpush.bf16.msra.mxu0 0
        %1961 = vmatpush.bf16.msra.mxu0 0
        %1962 = vmatpush.bf16.msra.mxu0 0
        %1963 = vmatpush.bf16.msra.mxu0 0
        %1964 = vmatpush.bf16.msra.mxu0 %v1934
        %1965 = vmatpush.bf16.msra.mxu0 %v1932
        %1966 = vmatmul.bf16.gmra.mxu0 %v1943
        %v1967 = vpop.f32.mrf.mxu0
        %v1968 = vadd.f32 %v1939, %v1967
        %v1969 = vpop.f32.mrf.mxu0
        %1970 = vdwg.mxu0
        %v1971 = vadd.f32 %v1955, %v1968
        %1972 = vadd.xlane.f32.xlu0 %v1971
        %v1973 = vpop.xlane.xlu0 %1972
        %v1974 = vrcp.pop 256.0
        %v1975 = vmul.f32 256.0, %v1974
        %v1976 = vsub.f32 1.0, %v1975
        %v1977 = vmul.f32 %v1974, %v1976
        %v1978 = vadd.f32 %v1974, %v1977
        %vm1979 = vweird.f32 %v1974
        %v1980 = vsel %vm1979, %v1974, %v1978
        %v1981 = vmul.f32 %v1973, %v1980
        %v1982 = vld [vmem:[%s7] sm:$0xff]
        %v1983 = vmul.f32 %v1982, %v1981
        %vm1984 = vcmask 7168
        %v1985 = vsel %vm1984, %v1983, 0.0
        %v1986 = vrot.slane %v1985, 4
        %v1987 = vadd.f32 %v1985, %v1986
        %v1988 = vrot.slane %v1987, 2
        %v1989 = vadd.f32 %v1987, %v1988
        %v1990 = vrot.slane %v1989, 1
        %v1991 = vadd.f32 %v1989, %v1990
        %v1992 = vmax.f32 %v1991, 0.0
        %v1993 = vld [vmem:[%s8] sm:$0xff]
        %v1994 = vmul.f32 %v1993, %v1992
        %v1995 = vadd.f32 %v1994, 0.0
        %v1996 = vxor.u32 %v1995, 2147483648
        %v1997 = vmul.f32 %v1996, 1.442695
        %v1998 = vpow.pop %v1997
        %v1999 = vadd.f32 %v1998, 1.0
        %v2000 = vrcp.pop %v1999
        %v2001 = vmul.f32 %v1999, %v2000
        %v2002 = vsub.f32 1.0, %v2001
        %v2003 = vmul.f32 %v2000, %v2002
        %v2004 = vadd.f32 %v2000, %v2003
        %vm2005 = vweird.f32 %v1999
        %vm2006 = vweird.f32 %v2000
        %vm2007 = vmor %vm2005, %vm2006
        %v2008 = vsel %vm2007, %v2000, %v2004
        %v2009 = vand.u32 2147483647, %v1999
        %vm2010 = vcmp.eq.f32.partialorder %v2009, 8.507059e+37
        %v2011 = vand.u32 %v1999, 2147483648
        %v2012 = vor.u32 1.1754944e-38, %v2011
        %v2013 = vsel %vm2010, %v2012, %v2008
        %v2014 = vmul.f32 1.0, %v2013
        %2016 = vset.pattern.permute.xlu0 0
        %2017 = vperm.xlu0 %2016, %v2014
        %v2018 = vpop.permute.xlu0 %2017
        %v2020 = vmul.f32 %v1955, %v2018
        %v2021 = vmul.f32 %v1968, %v2018
        %v2022 = vadd.f32 %v332, %v2020
        %v2023 = vadd.f32 %v333, %v2021
        %2024 = vst [vmem:[%s325] sm:$0xff] %v2022
        %2025 = vst [vmem:[%s325 + $0x8] sm:$0xff] %v2023
        %s2026 = sand.u32 %s225, 1
        %s2027 = scalar_lea.sflag [#allocation3], %s2026
        %s2028 = sand.u32 %s225, 1
        %s2029 = smul.addr %s2028, 16
        %s2030 = scalar_lea.vmem [#allocation2], %s2029
        // Predicated region
        $region57: #{tpu_custom_call.1} parent=55 // pred_check
          %p2031 = pneg %p235
        $region58: #{tpu_custom_call.1} parent=55 // pred_check_branch
          %2033 = sbr.rel (%p2031) target = $region60
        $region59: #{tpu_custom_call.1} parent=55 // pred_region
          %2035 = vsyncadd %s2027, 0
          %s2036 = smul.addr %s23, 2
          %s2037 = smul.addr %s2036, 8
          %s2038 = scalar_lea.hbm %s9, %s2037
          %s2040 = sshll.u32 %s2030, 4
          %s2041 = int_to_ptr.vmem [resolvable:$true] %s2040
          %s2042 = sshll.u32 %s2038, 4
          %s2043 = int_to_ptr.hbm [resolvable:$true] %s2042
          %2045 = dma.vmem_to_hbm [thread:$0]  %s2041, 256, %s2043, %s2027
        $region60: #{tpu_custom_call.1} parent=55 // pred_fallthru
          _
      $region56: #{tpu_custom_call.1} parent=5 // pred_fallthru
        _
      %p2046 = scmp.le.s32.totalorder 2, %s18
      // Predicated region
      $region61: #{tpu_custom_call.1} parent=5 // pred_check
        %p2047 = pneg %p2046
      $region62: #{tpu_custom_call.1} parent=5 // pred_check_branch
        %2049 = sbr.rel (%p2047) target = $region64
      $region63: #{tpu_custom_call.1} parent=5 // pred_region
        %s2050 = ssub.s32 %s18, 2
        // Predicated region
        $region65: #{tpu_custom_call.1} parent=63 // pred_check
          %p2051 = pneg %p241
        $region66: #{tpu_custom_call.1} parent=63 // pred_check_branch
          %2053 = sbr.rel (%p2051) target = $region68
        $region67: #{tpu_custom_call.1} parent=63 // pred_region
          %s2054 = sand.u32 %s226, 1
          %s2055 = scalar_lea.sflag [#allocation3], %s2054
          %s2056 = sand.u32 %s226, 1
          %s2057 = smul.addr %s2056, 16
          %s2058 = scalar_lea.vmem [#allocation2], %s2057
          %2060 = dma.done %s2055, 256
        $region68: #{tpu_custom_call.1} parent=63 // pred_fallthru
          _
      $region64: #{tpu_custom_call.1} parent=5 // pred_fallthru
        _
    $region6: #{tpu_custom_call.1} parent=1 // loop_footer
      %s22 = sadd.s32 1, %s18
    $region7: #{tpu_custom_call.1} parent=1 // loop_footer_branch
      %17 = sbr.rel target = $region3
    $region8: #{tpu_custom_call.1} parent=1 // loop_exit
      _
    %2061 = vsyncpa [#allocation3], 1
    %s2062 = scalar_lea.sflag [#allocation3], 1
    %2063 = vsyncpa %s2062, 1

</llo_original>
